<compile_context>
chip_gen: v7x
topology: tpu7x:2x2x1
jax: 0.10.0
libtpu: 0.0.40
codegen_flags: <defaults>
</compile_context>

<pallas_src>
import functools

import jax
import jax.numpy as jnp
from jax.experimental import pallas as pl
from jax.experimental.pallas import tpu as pltpu


def _round_up(a, b):
    return -(-a // b) * b


def _pick_c_tile(c_out):
    # Largest lane-dense C_out tile that wastes at most one 128-lane group of
    # channel padding (review: avoid 40-60% dead MXU columns / dead stores).
    for ct in (512, 256, 128):
        cp = _round_up(c_out, ct)
        if cp - c_out <= 128:
            return ct, cp
    return 128, _round_up(c_out, 128)   # unreachable (128 always qualifies)


# ----------------------------- Pallas kernel --------------------------------
def _conv_norm_relu_kernel(x_ref, w_ref, shift_ref, o_ref, *,
                           ksize, stride, rh, wo_pad, rq, wq, c_in, fuse_kh):
    """One (sample, C_out-tile, H-tile) grid step.

    x_ref:     (stride*RQ, stride*WQ, C_in) bf16 stride-phase-reordered slab:
               element [ph*RQ + j, pw*WQ + m, c] == image[j*stride+ph, m*stride+pw, c]
    w_ref:     fuse_kh: (K*K*C_in, Ct)  else (K, K*C_in, Ct)   bf16, BN scale folded
    shift_ref: (1, Ct)          f32 folded conv-bias + BN shift
    o_ref:     (Rh*Wo_pad, Ct)  output slab, flattened rows (lane/sublane dense)
    """
    shift = shift_ref[...]                       # (1, Ct) -- added once per slab
    m = rh * wo_pad
    ct = o_ref.shape[-1]

    def fused_taps(kh_list):
        # Ref-direct contiguous tap reads, packed along the contraction axis.
        taps = []
        for kh in kh_list:
            r0 = (kh % stride) * rq + kh // stride
            for kw in range(ksize):
                c0 = (kw % stride) * wq + kw // stride
                t = x_ref[pl.ds(r0, rh), pl.ds(c0, wo_pad), :]   # (Rh, Wo_pad, C_in)
                taps.append(t.reshape(m, c_in))   # Wo_pad % 16 == 0 -> layout-trivial
        return taps[0] if len(taps) == 1 else jnp.concatenate(taps, axis=-1)

    if fuse_kh:
        # All K*K taps in one matmul: contraction depth K*K*C_in.
        a = fused_taps(range(ksize))                             # (M, K*K*C_in)
        acc = jnp.dot(a, w_ref[...], preferred_element_type=jnp.float32)
    else:
        # K matmuls of depth K*C_in; only one kh-group of weights live at a time.
        acc = jnp.zeros((m, ct), jnp.float32)
        for kh in range(ksize):
            a = fused_taps([kh])                                 # (M, K*C_in)
            acc = acc + jnp.dot(a, w_ref[kh],
                                preferred_element_type=jnp.float32)

    o_ref[...] = jnp.maximum(acc + shift, 0.0).astype(o_ref.dtype)


# ------------------------------- wrapper -------------------------------------
def conv2d_norm_relu(x_nchw, weight_oihw, bias, gamma, beta, run_mean, run_var,
                     *, stride=1, padding=0, eps=1e-5, out_dtype=jnp.bfloat16):
    """Forward pass of Conv2dNormRelu.

    x_nchw:      [N, C_in, H, W]       (PyTorch layout)
    weight_oihw: [C_out, C_in, K, K]
    bias / gamma / beta / run_mean / run_var: [C_out]
    returns:     [N, C_out, Ho, Wo]    (out_dtype; pass jnp.float32 for f32 output)
    """
    n, c_in, h, w = x_nchw.shape
    c_out, c_in_w, k, k_w = weight_oihw.shape
    assert c_in_w == c_in and k_w == k
    s = int(stride)

    hp, wp = h + 2 * padding, w + 2 * padding
    ho = (hp - k) // s + 1
    wo = (wp - k) // s + 1
    assert ho > 0 and wo > 0

    # ---- fold conv bias + BatchNorm (inference) into weight scale / shift ----
    scale = gamma / jnp.sqrt(run_var + eps)                       # [C_out]
    shift = beta + (bias - run_mean) * scale                      # [C_out]
    w_taps = jnp.transpose(weight_oihw, (2, 3, 1, 0)) * scale     # (K, K, Cin, Cout)

    # ---- tiling choices ------------------------------------------------------
    ct, cp = _pick_c_tile(c_out)
    n_ct = cp // ct

    wo_pad = _round_up(wo, 16)               # bf16 sublane tile -> dense stores/reshapes
    qmax = (k - 1) // s                      # halo (in phase rows / phase cols)
    wq = wo_pad + qmax
    wp_ext = max(wq * s, _round_up(wp, s))   # zero-extended width, multiple of stride
    wq_arr = wp_ext // s

    fuse_kh = k * k * c_in <= 128            # full fusion only while the fused operand
    d_buf = (k * k if fuse_kh else k) * c_in #   / weight value stays small (no spills)
    out_isz = jnp.dtype(out_dtype).itemsize

    def _step_bytes(rh_):
        rq_ = rh_ + qmax
        m_ = rh_ * wo_pad
        in_b = (s * rq_) * wp_ext * c_in * 2       # bf16 input slab
        out_b = m_ * ct * out_isz                  # output block
        w_b = k * k * c_in * ct * 2                # resident weights
        return 2 * (in_b + out_b) + w_b + m_ * ct * 4 + m_ * d_buf * 2

    budget = 20 << 20                        # fits every generation (v7x: 64 MiB phys)
    rh = ho                                  # default: one H-tile per sample
    if _step_bytes(rh) > budget or ho * wo_pad > 8192:
        rh = min(_round_up(ho, 8), max(8, _round_up(pl.cdiv(2048, wo_pad), 8)))
        while rh > 8 and _step_bytes(rh) > budget:
            rh -= 8
    ht = pl.cdiv(ho, rh)
    ho_pad = ht * rh
    rq = rh + qmax
    m = rh * wo_pad

    # ---- host-side layout ----------------------------------------------------
    # NCHW -> NHWC bf16, zero pad (conv padding + enough extra so every H-tile
    # slab and the stride-phase reshape stay in bounds; extra rows/cols only
    # feed output rows/cols that get sliced off).
    x_nhwc = jnp.transpose(x_nchw, (0, 2, 3, 1)).astype(jnp.bfloat16)
    hp_ext = max(hp, (ht - 1) * rh * s + rq * s)
    x_pe = jnp.pad(x_nhwc, ((0, 0),
                            (padding, hp_ext - hp + padding),
                            (padding, wp_ext - wp + padding),
                            (0, 0)))

    # Stride-phase split of W: col m*s + pw  ->  merged index pw*WQ + m, so each
    # conv tap is a contiguous in-kernel read for any stride.
    x_pe = x_pe.reshape(n, hp_ext, wq_arr, s, c_in)
    x_pe = jnp.transpose(x_pe, (0, 1, 3, 2, 4)).reshape(n, hp_ext, s * wq_arr, c_in)

    # Gather each H-tile's halo'd row slab (rows also stride-phase ordered).
    # Overhead vs. the raw image is only the halo rows per tile -- NOT an
    # im2col -- and it lets plain BlockSpec double-buffering stream
    # overlapping H-tiles without manual DMA.
    t_idx = jnp.arange(ht)[:, None, None]
    ph_idx = jnp.arange(s)[None, :, None]
    j_idx = jnp.arange(rq)[None, None, :]
    rows = (t_idx * (rh * s) + j_idx * s + ph_idx).reshape(ht, s * rq)
    xg = x_pe[:, rows]                       # (N, Ht, s*RQ, s*WQ, C_in)

    # Weights: BN scale folded, C_out padded lane-dense, contraction-major
    # layout matching the in-kernel tap packing.
    w_taps = jnp.pad(w_taps, ((0, 0), (0, 0), (0, 0), (0, cp - c_out)))
    if fuse_kh:
        w_taps = w_taps.reshape(k * k * c_in, cp).astype(jnp.bfloat16)
        w_spec = pl.BlockSpec((k * k * c_in, ct), lambda i, j, t: (0, j))
    else:
        w_taps = w_taps.reshape(k, k * c_in, cp).astype(jnp.bfloat16)
        w_spec = pl.BlockSpec((k, k * c_in, ct), lambda i, j, t: (0, 0, j))
    shift2d = jnp.pad(shift, (0, cp - c_out)).reshape(1, cp).astype(jnp.float32)

    # ---- pallas call ---------------------------------------------------------
    kernel = functools.partial(
        _conv_norm_relu_kernel, ksize=k, stride=s, rh=rh, wo_pad=wo_pad,
        rq=rq, wq=wq_arr, c_in=c_in, fuse_kh=fuse_kh)

    flops = 2 * n * ho_pad * wo_pad * k * k * c_in * cp
    bytes_accessed = (xg.size * 2 * n_ct + w_taps.size * 2 * n
                      + shift2d.size * 4 + n * ho_pad * wo_pad * cp * out_isz)
    vmem_limit = int(min(max(2 * _step_bytes(rh), 16 << 20), 48 << 20))

    out_flat = pl.pallas_call(
        kernel,
        out_shape=jax.ShapeDtypeStruct((n, ho_pad * wo_pad, cp), out_dtype),
        grid_spec=pltpu.PrefetchScalarGridSpec(
            num_scalar_prefetch=0,
            grid=(n, n_ct, ht),
            in_specs=[
                # per-(sample, H-tile) input slab; weights/shift stay resident
                # across the (innermost) H axis.
                pl.BlockSpec((None, None, s * rq, s * wq_arr, c_in),
                             lambda i, j, t: (i, t, 0, 0, 0)),
                w_spec,
                pl.BlockSpec((1, ct), lambda i, j, t: (0, j)),
            ],
            out_specs=pl.BlockSpec((None, m, ct), lambda i, j, t: (i, t, j)),
        ),
        compiler_params=pltpu.CompilerParams(
            dimension_semantics=("parallel", "parallel", "parallel"),
            vmem_limit_bytes=vmem_limit),
        cost_estimate=pl.CostEstimate(flops=flops, transcendentals=0,
                                      bytes_accessed=bytes_accessed),
    )(xg, w_taps, shift2d)

    out = out_flat.reshape(n, ho_pad, wo_pad, cp)[:, :ho, :wo, :c_out]
    return jnp.transpose(out, (0, 3, 1, 2))                  # NHWC -> NCHW


# ------------------------------ reference ------------------------------------
def _reference(x, w, b, gamma, beta, mean, var, stride, padding, eps=1e-5):
    y = jax.lax.conv_general_dilated(
        x, w, window_strides=(stride, stride),
        padding=[(padding, padding), (padding, padding)],
        dimension_numbers=("NCHW", "OIHW", "NCHW"))
    y = y + b[None, :, None, None]
    y = (y - mean[None, :, None, None]) / jnp.sqrt(var + eps)[None, :, None, None]
    y = y * gamma[None, :, None, None] + beta[None, :, None, None]
    return jnp.maximum(y, 0.0)


def _run_case(key, *, n, c_in, hw, c_out, k, stride, padding):
    ks = jax.random.split(key, 7)
    x = jax.random.normal(ks[0], (n, c_in, hw, hw), dtype=jnp.float32)
    weight = jax.random.normal(ks[1], (c_out, c_in, k, k), dtype=jnp.float32) * 0.1
    bias = jax.random.normal(ks[2], (c_out,), dtype=jnp.float32) * 0.1
    gamma = 1.0 + 0.1 * jax.random.normal(ks[3], (c_out,), dtype=jnp.float32)
    beta = 0.1 * jax.random.normal(ks[4], (c_out,), dtype=jnp.float32)
    mean = 0.1 * jax.random.normal(ks[5], (c_out,), dtype=jnp.float32)
    var = jnp.abs(jax.random.normal(ks[6], (c_out,), dtype=jnp.float32)) + 0.5

    fwd = jax.jit(functools.partial(conv2d_norm_relu,
                                    stride=stride, padding=padding))
    out = jax.block_until_ready(fwd(x, weight, bias, gamma, beta, mean, var))
    ref = _reference(x, weight, bias, gamma, beta, mean, var, stride, padding)
    assert out.shape == ref.shape, (out.shape, ref.shape)
    outf = out.astype(jnp.float32)
    err = float(jnp.max(jnp.abs(outf - ref)))
    # bf16 MXU operands + bf16 output vs. the f32 reference.
    assert jnp.allclose(outf, ref, atol=5e-2, rtol=5e-2), \
        f"mismatch vs reference (max abs err {err})"


# -------------------------------- main ----------------------------------------
if __name__ == "__main__":
    key = jax.random.PRNGKey(0)
    k1, k2, k3 = jax.random.split(key, 3)

    # Case 1: module defaults (kernel=3, stride=1, padding=0), fused-tap path.
    _run_case(k1, n=2, c_in=4, hw=16, c_out=8, k=3, stride=1, padding=0)
    # Case 2: stride=2, padding=1, odd spatial size (validates the stride /
    # padding / ragged-edge paths the previous version never exercised).
    _run_case(k2, n=2, c_in=3, hw=17, c_out=16, k=3, stride=2, padding=1)
    # Case 3: larger C_in + larger feature map -> per-kh fusion path and the
    # H-tiled grid (halo slabs, padded output rows sliced off).
    _run_case(k3, n=2, c_in=32, hw=96, c_out=8, k=3, stride=1, padding=0)

    print("KERNEL_OK")
</pallas_src>

<mosaic_0001>
module attributes {stable_mosaic.version = 11 : i64} {
  func.func @_conv_norm_relu_kernel(%arg0: i32, %arg1: i32, %arg2: i32, %arg3: memref<1x1x16x18x4xbf16, #tpu.memory_space<vmem>>, %arg4: memref<36x128xbf16, #tpu.memory_space<vmem>>, %arg5: memref<1x128xf32, #tpu.memory_space<vmem>>, %arg6: memref<1x224x128xbf16, #tpu.memory_space<vmem>>) attributes {dimension_semantics = [#tpu.dimension_semantics<parallel>, #tpu.dimension_semantics<parallel>, #tpu.dimension_semantics<parallel>], iteration_bounds = array<i64: 2, 1, 1>, scalar_prefetch = 0 : i64, scratch_operands = 0 : i64, tpu.core_type = #tpu.core_type<tc>, window_params = [{transform_indices = @transform_0, window_bounds = array<i64: 1, 1, 16, 18, 4>}, {transform_indices = @transform_1, window_bounds = array<i64: 36, 128>}, {transform_indices = @transform_2, window_bounds = array<i64: 1, 128>}, {transform_indices = @transform_3, window_bounds = array<i64: 1, 224, 128>}]} {
    %c0 = arith.constant 0 : index
    %c0_0 = arith.constant 0 : index
    %0 = vector.load %arg5[%c0, %c0_0] : memref<1x128xf32, #tpu.memory_space<vmem>>, vector<1x128xf32>
    %c0_1 = arith.constant 0 : index
    %c0_2 = arith.constant 0 : index
    %c0_3 = arith.constant 0 : index
    %c0_4 = arith.constant 0 : index
    %c0_5 = arith.constant 0 : index
    %1 = vector.load %arg3[%c0_1, %c0_2, %c0_3, %c0_4, %c0_5] : memref<1x1x16x18x4xbf16, #tpu.memory_space<vmem>>, vector<1x1x14x16x4xbf16>
    %2 = vector.shape_cast %1 : vector<1x1x14x16x4xbf16> to vector<14x16x4xbf16>
    %3 = vector.shape_cast %2 : vector<14x16x4xbf16> to vector<224x4xbf16>
    %c0_6 = arith.constant 0 : index
    %c0_7 = arith.constant 0 : index
    %c0_8 = arith.constant 0 : index
    %c1 = arith.constant 1 : index
    %c0_9 = arith.constant 0 : index
    %4 = vector.load %arg3[%c0_6, %c0_7, %c0_8, %c1, %c0_9] : memref<1x1x16x18x4xbf16, #tpu.memory_space<vmem>>, vector<1x1x14x16x4xbf16>
    %5 = vector.shape_cast %4 : vector<1x1x14x16x4xbf16> to vector<14x16x4xbf16>
    %6 = vector.shape_cast %5 : vector<14x16x4xbf16> to vector<224x4xbf16>
    %c0_10 = arith.constant 0 : index
    %c0_11 = arith.constant 0 : index
    %c0_12 = arith.constant 0 : index
    %c2 = arith.constant 2 : index
    %c0_13 = arith.constant 0 : index
    %7 = vector.load %arg3[%c0_10, %c0_11, %c0_12, %c2, %c0_13] : memref<1x1x16x18x4xbf16, #tpu.memory_space<vmem>>, vector<1x1x14x16x4xbf16>
    %8 = vector.shape_cast %7 : vector<1x1x14x16x4xbf16> to vector<14x16x4xbf16>
    %9 = vector.shape_cast %8 : vector<14x16x4xbf16> to vector<224x4xbf16>
    %c0_14 = arith.constant 0 : index
    %c0_15 = arith.constant 0 : index
    %c1_16 = arith.constant 1 : index
    %c0_17 = arith.constant 0 : index
    %c0_18 = arith.constant 0 : index
    %10 = vector.load %arg3[%c0_14, %c0_15, %c1_16, %c0_17, %c0_18] : memref<1x1x16x18x4xbf16, #tpu.memory_space<vmem>>, vector<1x1x14x16x4xbf16>
    %11 = vector.shape_cast %10 : vector<1x1x14x16x4xbf16> to vector<14x16x4xbf16>
    %12 = vector.shape_cast %11 : vector<14x16x4xbf16> to vector<224x4xbf16>
    %c0_19 = arith.constant 0 : index
    %c0_20 = arith.constant 0 : index
    %c1_21 = arith.constant 1 : index
    %c1_22 = arith.constant 1 : index
    %c0_23 = arith.constant 0 : index
    %13 = vector.load %arg3[%c0_19, %c0_20, %c1_21, %c1_22, %c0_23] : memref<1x1x16x18x4xbf16, #tpu.memory_space<vmem>>, vector<1x1x14x16x4xbf16>
    %14 = vector.shape_cast %13 : vector<1x1x14x16x4xbf16> to vector<14x16x4xbf16>
    %15 = vector.shape_cast %14 : vector<14x16x4xbf16> to vector<224x4xbf16>
    %c0_24 = arith.constant 0 : index
    %c0_25 = arith.constant 0 : index
    %c1_26 = arith.constant 1 : index
    %c2_27 = arith.constant 2 : index
    %c0_28 = arith.constant 0 : index
    %16 = vector.load %arg3[%c0_24, %c0_25, %c1_26, %c2_27, %c0_28] : memref<1x1x16x18x4xbf16, #tpu.memory_space<vmem>>, vector<1x1x14x16x4xbf16>
    %17 = vector.shape_cast %16 : vector<1x1x14x16x4xbf16> to vector<14x16x4xbf16>
    %18 = vector.shape_cast %17 : vector<14x16x4xbf16> to vector<224x4xbf16>
    %c0_29 = arith.constant 0 : index
    %c0_30 = arith.constant 0 : index
    %c2_31 = arith.constant 2 : index
    %c0_32 = arith.constant 0 : index
    %c0_33 = arith.constant 0 : index
    %19 = vector.load %arg3[%c0_29, %c0_30, %c2_31, %c0_32, %c0_33] : memref<1x1x16x18x4xbf16, #tpu.memory_space<vmem>>, vector<1x1x14x16x4xbf16>
    %20 = vector.shape_cast %19 : vector<1x1x14x16x4xbf16> to vector<14x16x4xbf16>
    %21 = vector.shape_cast %20 : vector<14x16x4xbf16> to vector<224x4xbf16>
    %c0_34 = arith.constant 0 : index
    %c0_35 = arith.constant 0 : index
    %c2_36 = arith.constant 2 : index
    %c1_37 = arith.constant 1 : index
    %c0_38 = arith.constant 0 : index
    %22 = vector.load %arg3[%c0_34, %c0_35, %c2_36, %c1_37, %c0_38] : memref<1x1x16x18x4xbf16, #tpu.memory_space<vmem>>, vector<1x1x14x16x4xbf16>
    %23 = vector.shape_cast %22 : vector<1x1x14x16x4xbf16> to vector<14x16x4xbf16>
    %24 = vector.shape_cast %23 : vector<14x16x4xbf16> to vector<224x4xbf16>
    %c0_39 = arith.constant 0 : index
    %c0_40 = arith.constant 0 : index
    %c2_41 = arith.constant 2 : index
    %c2_42 = arith.constant 2 : index
    %c0_43 = arith.constant 0 : index
    %25 = vector.load %arg3[%c0_39, %c0_40, %c2_41, %c2_42, %c0_43] : memref<1x1x16x18x4xbf16, #tpu.memory_space<vmem>>, vector<1x1x14x16x4xbf16>
    %26 = vector.shape_cast %25 : vector<1x1x14x16x4xbf16> to vector<14x16x4xbf16>
    %27 = vector.shape_cast %26 : vector<14x16x4xbf16> to vector<224x4xbf16>
    %28 = tpu.concatenate %3, %6, %9, %12, %15, %18, %21, %24, %27 in 1 : vector<224x4xbf16>, vector<224x4xbf16>, vector<224x4xbf16>, vector<224x4xbf16>, vector<224x4xbf16>, vector<224x4xbf16>, vector<224x4xbf16>, vector<224x4xbf16>, vector<224x4xbf16> -> vector<224x36xbf16>
    %c0_44 = arith.constant 0 : index
    %c0_45 = arith.constant 0 : index
    %29 = vector.load %arg4[%c0_44, %c0_45] : memref<36x128xbf16, #tpu.memory_space<vmem>>, vector<36x128xbf16>
    %cst = arith.constant dense<0.000000e+00> : vector<224x128xf32>
    %30 = tpu.matmul %28, %29, %cst {dimension_numbers = #tpu.dot_dimension_numbers<[1], [0], [0], [1], [0, 0, 1, 1], [], []>} : vector<224x36xbf16>, vector<36x128xbf16>, vector<224x128xf32> -> vector<224x128xf32>
    %31 = vector.broadcast %0 : vector<1x128xf32> to vector<224x128xf32>
    %32 = arith.addf %30, %31 : vector<224x128xf32>
    %cst_46 = arith.constant 0.000000e+00 : f32
    %33 = vector.broadcast %cst_46 : f32 to vector<224x128xf32>
    %34 = arith.maximumf %32, %33 : vector<224x128xf32>
    %35 = arith.truncf %34 : vector<224x128xf32> to vector<224x128xbf16>
    %c0_47 = arith.constant 0 : index
    %c0_48 = arith.constant 0 : index
    %c0_49 = arith.constant 0 : index
    %36 = vector.load %arg6[%c0_47, %c0_48, %c0_49] : memref<1x224x128xbf16, #tpu.memory_space<vmem>>, vector<1x224x128xbf16>
    %37 = vector.shape_cast %36 : vector<1x224x128xbf16> to vector<224x128xbf16>
    %38 = vector.shape_cast %35 : vector<224x128xbf16> to vector<1x224x128xbf16>
    tpu.vector_store %arg6[%c0_47, %c0_48, %c0_49], %38 {strides = array<i32>} : memref<1x224x128xbf16, #tpu.memory_space<vmem>>, vector<1x224x128xbf16>,
    return
  }
  func.func @transform_0(%arg0: i32, %arg1: i32, %arg2: i32) -> (i32, i32, i32, i32, i32) {
    %c0_i32 = arith.constant 0 : i32
    %c0_i32_0 = arith.constant 0 : i32
    %c0_i32_1 = arith.constant 0 : i32
    %c0_i32_2 = arith.constant 0 : i32
    return %arg0, %arg2, %c0_i32, %c0_i32_0, %c0_i32_1 : i32, i32, i32, i32, i32
  }
  func.func @transform_1(%arg0: i32, %arg1: i32, %arg2: i32) -> (i32, i32) {
    %c0_i32 = arith.constant 0 : i32
    %c0_i32_0 = arith.constant 0 : i32
    return %c0_i32, %arg1 : i32, i32
  }
  func.func @transform_2(%arg0: i32, %arg1: i32, %arg2: i32) -> (i32, i32) {
    %c0_i32 = arith.constant 0 : i32
    %c0_i32_0 = arith.constant 0 : i32
    return %c0_i32, %arg1 : i32, i32
  }
  func.func @transform_3(%arg0: i32, %arg1: i32, %arg2: i32) -> (i32, i32, i32) {
    %c0_i32 = arith.constant 0 : i32
    return %arg0, %arg2, %arg1 : i32, i32, i32
  }
}

</mosaic_0001>

<llo_original>
// kernel: conv2d_norm_relu.1
$region0: #{conv2d_norm_relu.1}
  #allocation0 [shape = 'u32[]', space=smem, size = 0x4, offset = 0x4, fixed_abs, tag = 'smem constant byte address 0x4 - core index']
  #allocation1 [shape = 'u32[144,128]{1,0:T(1,128)}', space=vmem, size = 0x12000, scoped, tag = 'internal scratch']
  %s0 = inlined_call_operand.vmem [shape: bf16[2,1,16,18,4], index: 0, kind: input, shape index: {}]
  %s1 = inlined_call_operand.vmem [shape: bf16[36,128], index: 1, kind: input, shape index: {}]
  %s2 = inlined_call_operand.vmem [shape: f32[1,128], index: 2, kind: input, shape index: {}]
  %s3 = inlined_call_operand.vmem [shape: bf16[2,224,128], index: 3, kind: output, shape index: {}]
  %s4 = sld [smem:[#allocation0]]
  $region45: #{conv2d_norm_relu.1} parent=0
    _
  %s6 = ssub.s32 1, %s4
  %s7 = scalar_select 0, %s6, %s4
  loop: start=0, step=1, limit=4
  $region2: #{conv2d_norm_relu.1} parent=0 // loop_pre_header
    _
  $region3: #{conv2d_norm_relu.1} parent=0 // loop_header
    %s9 = sphi 0, %s13
    %p10 = scmp.ge.s32.totalorder %s9, 4
    %s16 = sphi 0, %s35
    %s17 = sphi 0, %s31
    %s18 = sphi 0, %s27
    %s19 = sphi 0, %s16
    %s20 = sphi 0, %s17
    %s21 = sphi 0, %s18
    %s22 = sphi 0, %s19
    %s23 = sphi 0, %s20
    %s24 = sphi 0, %s21
    %s40 = sphi 0, %s42
    %s43 = sphi 0, %s40
    %s44 = sphi 0, %s43
    %s60 = sphi 0, %s44
    %s66 = sphi 0, %s68
    %s69 = sphi 0, %s66
    %s70 = sphi 0, %s69
    %s86 = sphi 0, %s70
    %s92 = sphi 0, %s94
    %s95 = sphi 0, %s92
    %s96 = sphi 0, %s95
    %s112 = sphi 0, %s96
    %s122 = sphi 0, %s124
    %s125 = sphi 0, %s122
    %s126 = sphi 0, %s125
    %s142 = sphi 0, %s126
  $region4: #{conv2d_norm_relu.1} parent=0 // loop_header_branch
    %12 = sbr.rel (%p10) target = $region8
  $region5: #{conv2d_norm_relu.1} parent=0 // loop_body
    %s14 = ssub.s32 %s9, 1
    %s15 = ssub.s32 %s9, 2
    %s25 = sadd.s32 1, %s18
    %p26 = scmp.ge.s32.totalorder %s25, 1
    %s27 = scalar_select %p26, 0, %s25
    %s28 = sadd.s32 1, %s17
    %s29 = scalar_select %p26, %s28, %s17
    %p30 = scmp.ge.s32.totalorder %s29, 1
    %s31 = scalar_select %p30, 0, %s29
    %s32 = sadd.s32 1, %s16
    %s33 = scalar_select %p30, %s32, %s16
    %p34 = scmp.ge.s32.totalorder %s33, 2
    %s35 = scalar_select %p34, 0, %s33
    %s36 = ssub.s32 %s16, %s35
    %s37 = ssub.s32 %s18, %s27
    %s38 = sor.u32 %s36, %s37
    %p39 = scmp.eq.s32.totalorder %s38, 0
    %s41 = sadd.s32 %s40, 1
    %s42 = scalar_select %p39, %s40, %s41
    %p45 = pneg %p39
    %p46 = scmp.eq.s32.totalorder %s9, 1
    %p47 = por %p45, %p46
    %p48 = scmp.ne.s32.totalorder %s40, %s43
    %p49 = scmp.eq.s32.totalorder %s9, 0
    %p50 = por %p48, %p49
    %p51 = scmp.ne.s32.totalorder %s40, %s43
    %p52 = scmp.eq.s32.totalorder %s14, 1
    %p53 = por %p51, %p52
    %p54 = scmp.ne.s32.totalorder %s43, %s44
    %p55 = scmp.eq.s32.totalorder %s14, 0
    %p56 = por %p54, %p55
    %p57 = scmp.ne.s32.totalorder %s43, %s44
    %p58 = scmp.eq.s32.totalorder %s15, 1
    %p59 = por %p57, %p58
    %p61 = scmp.ne.s32.totalorder %s44, %s60
    %p62 = scmp.eq.s32.totalorder %s15, 0
    %p63 = por %p61, %p62
    %s64 = ssub.s32 %s17, %s31
    %p65 = scmp.eq.s32.totalorder %s64, 0
    %s67 = sadd.s32 %s66, 1
    %s68 = scalar_select %p65, %s66, %s67
    %p71 = pneg %p65
    %p72 = scmp.eq.s32.totalorder %s9, 1
    %p73 = por %p71, %p72
    %p74 = scmp.ne.s32.totalorder %s66, %s69
    %p75 = scmp.eq.s32.totalorder %s9, 0
    %p76 = por %p74, %p75
    %p77 = scmp.ne.s32.totalorder %s66, %s69
    %p78 = scmp.eq.s32.totalorder %s14, 1
    %p79 = por %p77, %p78
    %p80 = scmp.ne.s32.totalorder %s69, %s70
    %p81 = scmp.eq.s32.totalorder %s14, 0
    %p82 = por %p80, %p81
    %p83 = scmp.ne.s32.totalorder %s69, %s70
    %p84 = scmp.eq.s32.totalorder %s15, 1
    %p85 = por %p83, %p84
    %p87 = scmp.ne.s32.totalorder %s70, %s86
    %p88 = scmp.eq.s32.totalorder %s15, 0
    %p89 = por %p87, %p88
    %s90 = ssub.s32 %s17, %s31
    %p91 = scmp.eq.s32.totalorder %s90, 0
    %s93 = sadd.s32 %s92, 1
    %s94 = scalar_select %p91, %s92, %s93
    %p97 = pneg %p91
    %p98 = scmp.eq.s32.totalorder %s9, 1
    %p99 = por %p97, %p98
    %p100 = scmp.ne.s32.totalorder %s92, %s95
    %p101 = scmp.eq.s32.totalorder %s9, 0
    %p102 = por %p100, %p101
    %p103 = scmp.ne.s32.totalorder %s92, %s95
    %p104 = scmp.eq.s32.totalorder %s14, 1
    %p105 = por %p103, %p104
    %p106 = scmp.ne.s32.totalorder %s95, %s96
    %p107 = scmp.eq.s32.totalorder %s14, 0
    %p108 = por %p106, %p107
    %p109 = scmp.ne.s32.totalorder %s95, %s96
    %p110 = scmp.eq.s32.totalorder %s15, 1
    %p111 = por %p109, %p110
    %p113 = scmp.ne.s32.totalorder %s96, %s112
    %p114 = scmp.eq.s32.totalorder %s15, 0
    %p115 = por %p113, %p114
    %s116 = ssub.s32 %s16, %s35
    %s117 = ssub.s32 %s18, %s27
    %s118 = sor.u32 %s116, %s117
    %s119 = ssub.s32 %s17, %s31
    %s120 = sor.u32 %s118, %s119
    %p121 = scmp.eq.s32.totalorder %s120, 0
    %s123 = sadd.s32 %s122, 1
    %s124 = scalar_select %p121, %s122, %s123
    %p127 = pneg %p121
    %p128 = scmp.eq.s32.totalorder %s9, 1
    %p129 = por %p127, %p128
    %p130 = scmp.ne.s32.totalorder %s122, %s125
    %p131 = scmp.eq.s32.totalorder %s9, 0
    %p132 = por %p130, %p131
    %p133 = scmp.ne.s32.totalorder %s122, %s125
    %p134 = scmp.eq.s32.totalorder %s14, 1
    %p135 = por %p133, %p134
    %p136 = scmp.ne.s32.totalorder %s125, %s126
    %p137 = scmp.eq.s32.totalorder %s14, 0
    %p138 = por %p136, %p137
    %p139 = scmp.ne.s32.totalorder %s125, %s126
    %p140 = scmp.eq.s32.totalorder %s15, 1
    %p141 = por %p139, %p140
    %p143 = scmp.ne.s32.totalorder %s126, %s142
    %p144 = scmp.eq.s32.totalorder %s15, 0
    %p145 = por %p143, %p144
    %p146 = scmp.le.s32.totalorder 1, %s9
    %p147 = scmp.lt.s32.totalorder %s9, 3
    %p148 = pnand %p146, %p147
    %p149 = pneg %p148
    // Predicated region
    $region9: #{conv2d_norm_relu.1} parent=5 // pred_check
      _
    $region10: #{conv2d_norm_relu.1} parent=5 // pred_check_branch
      %151 = sbr.rel (%p148) target = $region12
    $region11: #{conv2d_norm_relu.1} parent=5 // pred_region
      %s152 = ssub.s32 %s9, 1
      // Predicated region
      $region13: #{conv2d_norm_relu.1} parent=11 // pred_check
        %p153 = pneg %p82
      $region14: #{conv2d_norm_relu.1} parent=11 // pred_check_branch
        %155 = sbr.rel (%p153) target = $region16
      $region15: #{conv2d_norm_relu.1} parent=11 // pred_region
        %p156 = scmp.lt.s32.totalorder %s20, 0
        %s157 = scalar_select %p156, %s20, 0
        %s158 = smul.addr %s157, 4
        %s159 = scalar_lea.vmem %s1, %s158
      $region16: #{conv2d_norm_relu.1} parent=11 // pred_fallthru
        _
      // Predicated region
      $region17: #{conv2d_norm_relu.1} parent=11 // pred_check
        %p160 = pneg %p108
      $region18: #{conv2d_norm_relu.1} parent=11 // pred_check_branch
        %162 = sbr.rel (%p160) target = $region20
      $region19: #{conv2d_norm_relu.1} parent=11 // pred_region
        %p163 = scmp.lt.s32.totalorder %s20, 0
        %s164 = scalar_select %p163, %s20, 0
        %s165 = scalar_lea.vmem %s2, %s164
      $region20: #{conv2d_norm_relu.1} parent=11 // pred_fallthru
        _
    $region12: #{conv2d_norm_relu.1} parent=5 // pred_fallthru
      _
    %p166 = scmp.lt.s32.totalorder %s9, 2
    // Predicated region
    $region21: #{conv2d_norm_relu.1} parent=5 // pred_check
      %p167 = pneg %p166
    $region22: #{conv2d_norm_relu.1} parent=5 // pred_check_branch
      %169 = sbr.rel (%p167) target = $region24
    $region23: #{conv2d_norm_relu.1} parent=5 // pred_region
      // Predicated region
      $region25: #{conv2d_norm_relu.1} parent=23 // pred_check
        %p170 = pneg %p50
      $region26: #{conv2d_norm_relu.1} parent=23 // pred_check_branch
        %172 = sbr.rel (%p170) target = $region28
      $region27: #{conv2d_norm_relu.1} parent=23 // pred_region
        %p173 = scmp.lt.s32.totalorder %s16, 1
        %s174 = scalar_select %p173, %s16, 1
        %p175 = scmp.lt.s32.totalorder %s18, 0
        %s176 = scalar_select %p175, %s18, 0
        %s177 = smul.addr %s176, 48
        %s178 = smul.addr %s174, 48
        %s179 = sadd.s32 %s177, %s178
        %s180 = smul.addr %s179, 4
        %s181 = scalar_lea.vmem %s0, %s180
      $region28: #{conv2d_norm_relu.1} parent=23 // pred_fallthru
        _
    $region24: #{conv2d_norm_relu.1} parent=5 // pred_fallthru
      _
    %p182 = scmp.le.s32.totalorder 1, %s9
    %p183 = scmp.lt.s32.totalorder %s9, 3
    %p184 = pnand %p182, %p183
    %p185 = pneg %p184
    // Predicated region
    $region29: #{conv2d_norm_relu.1} parent=5 // pred_check
      _
    $region30: #{conv2d_norm_relu.1} parent=5 // pred_check_branch
      %187 = sbr.rel (%p184) target = $region32
    $region31: #{conv2d_norm_relu.1} parent=5 // pred_region
      %s188 = ssub.s32 %s9, 1
      %p189 = scmp.lt.s32.totalorder %s19, 1
      %s190 = scalar_select %p189, %s19, 1
      %p191 = scmp.lt.s32.totalorder %s21, 0
      %s192 = scalar_select %p191, %s21, 0
      %s193 = smul.addr %s192, 48
      %s194 = smul.addr %s190, 48
      %s195 = sadd.s32 %s193, %s194
      %s196 = smul.addr %s195, 4
      %s197 = scalar_lea.vmem %s0, %s196
      %p198 = pneg %p56
      %p199 = pneg %p53
      %p200 = scmp.lt.s32.totalorder %s20, 0
      %s201 = scalar_select %p200, %s20, 0
      %s202 = smul.addr %s201, 4
      %s203 = scalar_lea.vmem %s1, %s202
      %p204 = pneg %p82
      %p205 = pneg %p79
      %p206 = scmp.lt.s32.totalorder %s20, 0
      %s207 = scalar_select %p206, %s20, 0
      %s208 = scalar_lea.vmem %s2, %s207
      %p209 = pneg %p108
      %p210 = pneg %p105
      %p211 = pneg %p138
      %p212 = pneg %p135
      %s213 = smul.u32 28, %s21
      %p214 = scmp.lt.s32.totalorder %s19, 1
      %s215 = scalar_select %p214, %s19, 1
      %p216 = scmp.lt.s32.totalorder %s213, 27
      %s217 = scalar_select %p216, %s213, 27
      %p218 = scmp.lt.s32.totalorder %s20, 0
      %s219 = scalar_select %p218, %s20, 0
      %s220 = sadd.s32 %s219, %s217
      %s221 = smul.addr %s215, 28
      %s222 = sadd.s32 %s220, %s221
      %s223 = smul.addr %s222, 4
      %s224 = scalar_lea.vmem %s3, %s223
      %p225 = scmp.lt.s32.totalorder %s19, 1
      %s226 = scalar_select %p225, %s19, 1
      %p227 = scmp.lt.s32.totalorder %s21, 0
      %s228 = scalar_select %p227, %s21, 0
      %s229 = smul.addr %s228, 48
      %s230 = smul.addr %s226, 48
      %s231 = sadd.s32 %s229, %s230
      %s232 = smul.addr %s231, 4
      %s233 = scalar_lea.vmem %s0, %s232
      %p234 = scmp.lt.s32.totalorder %s20, 0
      %s235 = scalar_select %p234, %s20, 0
      %s236 = smul.addr %s235, 4
      %s237 = scalar_lea.vmem %s1, %s236
      %p238 = scmp.lt.s32.totalorder %s20, 0
      %s239 = scalar_select %p238, %s20, 0
      %s240 = scalar_lea.vmem %s2, %s239
      %s241 = smul.u32 28, %s21
      %p242 = scmp.lt.s32.totalorder %s19, 1
      %s243 = scalar_select %p242, %s19, 1
      %p244 = scmp.lt.s32.totalorder %s241, 27
      %s245 = scalar_select %p244, %s241, 27
      %p246 = scmp.lt.s32.totalorder %s20, 0
      %s247 = scalar_select %p246, %s20, 0
      %s248 = sadd.s32 %s247, %s245
      %s249 = smul.addr %s243, 28
      %s250 = sadd.s32 %s248, %s249
      %s251 = smul.addr %s250, 4
      %s252 = scalar_lea.vmem %s3, %s251
      %s253 = smul.u32 28, %s21
      %v255 = vld [vmem:[%s240] sm:$0x1]
      %v256 = vld [vmem:[%s233] sm:$0xf]
      %v257 = vld [vmem:[%s233 + $0x4] sm:$0xf]
      %v258 = vld [vmem:[%s233 + $0xc] sm:$0xf]
      %v259 = vld [vmem:[%s233 + $0x10] sm:$0xf]
      %v260 = vld [vmem:[%s233 + $0x18] sm:$0xf]
      %v261 = vld [vmem:[%s233 + $0x1c] sm:$0xf]
      %v262 = vld [vmem:[%s233 + $0x24] sm:$0xf]
      %v263 = vld [vmem:[%s233 + $0x28] sm:$0xf]
      %v264 = vld [vmem:[%s233 + $0x30] sm:$0xf]
      %v265 = vld [vmem:[%s233 + $0x34] sm:$0xf]
      %v266 = vld [vmem:[%s233 + $0x3c] sm:$0xf]
      %v267 = vld [vmem:[%s233 + $0x40] sm:$0xf]
      %v268 = vld [vmem:[%s233 + $0x48] sm:$0xf]
      %v269 = vld [vmem:[%s233 + $0x4c] sm:$0xf]
      %v270 = vld [vmem:[%s233 + $0x54] sm:$0xf]
      %v271 = vld [vmem:[%s233 + $0x58] sm:$0xf]
      %v272 = vld [vmem:[%s233 + $0x60] sm:$0xf]
      %v273 = vld [vmem:[%s233 + $0x64] sm:$0xf]
      %v274 = vld [vmem:[%s233 + $0x6c] sm:$0xf]
      %v275 = vld [vmem:[%s233 + $0x70] sm:$0xf]
      %v276 = vld [vmem:[%s233 + $0x78] sm:$0xf]
      %v277 = vld [vmem:[%s233 + $0x7c] sm:$0xf]
      %v278 = vld [vmem:[%s233 + $0x84] sm:$0xf]
      %v279 = vld [vmem:[%s233 + $0x88] sm:$0xf]
      %v280 = vld [vmem:[%s233 + $0x90] sm:$0xf]
      %v281 = vld [vmem:[%s233 + $0x94] sm:$0xf]
      %v282 = vld [vmem:[%s233 + $0x9c] sm:$0xf]
      %v283 = vld [vmem:[%s233 + $0xa0] sm:$0xf]
      %v284 = vld [vmem:[%s233 + $0x8] sm:$0x1]
      %v285 = vld [vmem:[%s233 + $0x14] sm:$0x1]
      %v286 = vld [vmem:[%s233 + $0x20] sm:$0x1]
      %v287 = vld [vmem:[%s233 + $0x2c] sm:$0x1]
      %v288 = vld [vmem:[%s233 + $0x38] sm:$0x1]
      %v289 = vld [vmem:[%s233 + $0x44] sm:$0x1]
      %v290 = vld [vmem:[%s233 + $0x50] sm:$0x1]
      %v291 = vld [vmem:[%s233 + $0x5c] sm:$0x1]
      %v292 = vld [vmem:[%s233 + $0x68] sm:$0x1]
      %v293 = vld [vmem:[%s233 + $0x74] sm:$0x1]
      %v294 = vld [vmem:[%s233 + $0x80] sm:$0x1]
      %v295 = vld [vmem:[%s233 + $0x8c] sm:$0x1]
      %v296 = vld [vmem:[%s233 + $0x98] sm:$0x1]
      %v297 = vld [vmem:[%s233 + $0xa4] sm:$0x1]
      %vm298 = vsmask.f32 3328
      %vm299 = vsmask.f32 7440
      %vm300 = vmor %vm298, %vm299
      %v302 = vshrl.u32 %v256, 16
      %v304 = vrot.slane %v302, 4
      %v305 = vshll.u32 %v256, 16
      %v307 = vrot.slane %v305, 5
      %v308 = vor.u32 %v304, %v307
      %v309 = vrot.slane %v308, 4
      %v311 = vshll.u32 %v257, 16
      %v313 = vrot.slane %v311, 5
      %v314 = vsel %vm300, %v309, %v313
      %v315 = vshrl.u32 %v257, 16
      %v317 = vrot.slane %v315, 4
      %v318 = vor.u32 %v317, %v313
      %v319 = vrot.slane %v318, 4
      %v321 = vshll.u32 %v284, 16
      %v323 = vrot.slane %v321, 5
      %v324 = vsel %vm300, %v319, %v323
      %v326 = vshrl.u32 %v258, 16
      %v328 = vrot.slane %v326, 4
      %v329 = vshll.u32 %v258, 16
      %v331 = vrot.slane %v329, 5
      %v332 = vor.u32 %v328, %v331
      %v333 = vrot.slane %v332, 4
      %v335 = vshll.u32 %v259, 16
      %v337 = vrot.slane %v335, 5
      %v338 = vsel %vm300, %v333, %v337
      %v339 = vshrl.u32 %v259, 16
      %v341 = vrot.slane %v339, 4
      %v342 = vor.u32 %v341, %v337
      %v343 = vrot.slane %v342, 4
      %v345 = vshll.u32 %v285, 16
      %v347 = vrot.slane %v345, 5
      %v348 = vsel %vm300, %v343, %v347
      %v350 = vshrl.u32 %v260, 16
      %v352 = vrot.slane %v350, 4
      %v353 = vshll.u32 %v260, 16
      %v355 = vrot.slane %v353, 5
      %v356 = vor.u32 %v352, %v355
      %v357 = vrot.slane %v356, 4
      %v359 = vshll.u32 %v261, 16
      %v361 = vrot.slane %v359, 5
      %v362 = vsel %vm300, %v357, %v361
      %v363 = vshrl.u32 %v261, 16
      %v365 = vrot.slane %v363, 4
      %v366 = vor.u32 %v365, %v361
      %v367 = vrot.slane %v366, 4
      %v369 = vshll.u32 %v286, 16
      %v371 = vrot.slane %v369, 5
      %v372 = vsel %vm300, %v367, %v371
      %v374 = vshrl.u32 %v262, 16
      %v376 = vrot.slane %v374, 4
      %v377 = vshll.u32 %v262, 16
      %v379 = vrot.slane %v377, 5
      %v380 = vor.u32 %v376, %v379
      %v381 = vrot.slane %v380, 4
      %v383 = vshll.u32 %v263, 16
      %v385 = vrot.slane %v383, 5
      %v386 = vsel %vm300, %v381, %v385
      %v387 = vshrl.u32 %v263, 16
      %v389 = vrot.slane %v387, 4
      %v390 = vor.u32 %v389, %v385
      %v391 = vrot.slane %v390, 4
      %v393 = vshll.u32 %v287, 16
      %v395 = vrot.slane %v393, 5
      %v396 = vsel %vm300, %v391, %v395
      %v398 = vshrl.u32 %v264, 16
      %v400 = vrot.slane %v398, 4
      %v401 = vshll.u32 %v264, 16
      %v403 = vrot.slane %v401, 5
      %v404 = vor.u32 %v400, %v403
      %v405 = vrot.slane %v404, 4
      %v407 = vshll.u32 %v265, 16
      %v409 = vrot.slane %v407, 5
      %v410 = vsel %vm300, %v405, %v409
      %v411 = vshrl.u32 %v265, 16
      %v413 = vrot.slane %v411, 4
      %v414 = vor.u32 %v413, %v409
      %v415 = vrot.slane %v414, 4
      %v417 = vshll.u32 %v288, 16
      %v419 = vrot.slane %v417, 5
      %v420 = vsel %vm300, %v415, %v419
      %v422 = vshrl.u32 %v266, 16
      %v424 = vrot.slane %v422, 4
      %v425 = vshll.u32 %v266, 16
      %v427 = vrot.slane %v425, 5
      %v428 = vor.u32 %v424, %v427
      %v429 = vrot.slane %v428, 4
      %v431 = vshll.u32 %v267, 16
      %v433 = vrot.slane %v431, 5
      %v434 = vsel %vm300, %v429, %v433
      %v435 = vshrl.u32 %v267, 16
      %v437 = vrot.slane %v435, 4
      %v438 = vor.u32 %v437, %v433
      %v439 = vrot.slane %v438, 4
      %v441 = vshll.u32 %v289, 16
      %v443 = vrot.slane %v441, 5
      %v444 = vsel %vm300, %v439, %v443
      %v446 = vshrl.u32 %v268, 16
      %v448 = vrot.slane %v446, 4
      %v449 = vshll.u32 %v268, 16
      %v451 = vrot.slane %v449, 5
      %v452 = vor.u32 %v448, %v451
      %v453 = vrot.slane %v452, 4
      %v455 = vshll.u32 %v269, 16
      %v457 = vrot.slane %v455, 5
      %v458 = vsel %vm300, %v453, %v457
      %v459 = vshrl.u32 %v269, 16
      %v461 = vrot.slane %v459, 4
      %v462 = vor.u32 %v461, %v457
      %v463 = vrot.slane %v462, 4
      %v465 = vshll.u32 %v290, 16
      %v467 = vrot.slane %v465, 5
      %v468 = vsel %vm300, %v463, %v467
      %v470 = vshrl.u32 %v270, 16
      %v472 = vrot.slane %v470, 4
      %v473 = vshll.u32 %v270, 16
      %v475 = vrot.slane %v473, 5
      %v476 = vor.u32 %v472, %v475
      %v477 = vrot.slane %v476, 4
      %v479 = vshll.u32 %v271, 16
      %v481 = vrot.slane %v479, 5
      %v482 = vsel %vm300, %v477, %v481
      %v483 = vshrl.u32 %v271, 16
      %v485 = vrot.slane %v483, 4
      %v486 = vor.u32 %v485, %v481
      %v487 = vrot.slane %v486, 4
      %v489 = vshll.u32 %v291, 16
      %v491 = vrot.slane %v489, 5
      %v492 = vsel %vm300, %v487, %v491
      %v494 = vshrl.u32 %v272, 16
      %v496 = vrot.slane %v494, 4
      %v497 = vshll.u32 %v272, 16
      %v499 = vrot.slane %v497, 5
      %v500 = vor.u32 %v496, %v499
      %v501 = vrot.slane %v500, 4
      %v503 = vshll.u32 %v273, 16
      %v505 = vrot.slane %v503, 5
      %v506 = vsel %vm300, %v501, %v505
      %v507 = vshrl.u32 %v273, 16
      %v509 = vrot.slane %v507, 4
      %v510 = vor.u32 %v509, %v505
      %v511 = vrot.slane %v510, 4
      %v513 = vshll.u32 %v292, 16
      %v515 = vrot.slane %v513, 5
      %v516 = vsel %vm300, %v511, %v515
      %v518 = vshrl.u32 %v274, 16
      %v520 = vrot.slane %v518, 4
      %v521 = vshll.u32 %v274, 16
      %v523 = vrot.slane %v521, 5
      %v524 = vor.u32 %v520, %v523
      %v525 = vrot.slane %v524, 4
      %v527 = vshll.u32 %v275, 16
      %v529 = vrot.slane %v527, 5
      %v530 = vsel %vm300, %v525, %v529
      %v531 = vshrl.u32 %v275, 16
      %v533 = vrot.slane %v531, 4
      %v534 = vor.u32 %v533, %v529
      %v535 = vrot.slane %v534, 4
      %v537 = vshll.u32 %v293, 16
      %v539 = vrot.slane %v537, 5
      %v540 = vsel %vm300, %v535, %v539
      %v542 = vshrl.u32 %v276, 16
      %v544 = vrot.slane %v542, 4
      %v545 = vshll.u32 %v276, 16
      %v547 = vrot.slane %v545, 5
      %v548 = vor.u32 %v544, %v547
      %v549 = vrot.slane %v548, 4
      %v551 = vshll.u32 %v277, 16
      %v553 = vrot.slane %v551, 5
      %v554 = vsel %vm300, %v549, %v553
      %v555 = vshrl.u32 %v277, 16
      %v557 = vrot.slane %v555, 4
      %v558 = vor.u32 %v557, %v553
      %v559 = vrot.slane %v558, 4
      %v561 = vshll.u32 %v294, 16
      %v563 = vrot.slane %v561, 5
      %v564 = vsel %vm300, %v559, %v563
      %v566 = vshrl.u32 %v278, 16
      %v568 = vrot.slane %v566, 4
      %v569 = vshll.u32 %v278, 16
      %v571 = vrot.slane %v569, 5
      %v572 = vor.u32 %v568, %v571
      %v573 = vrot.slane %v572, 4
      %v575 = vshll.u32 %v279, 16
      %v577 = vrot.slane %v575, 5
      %v578 = vsel %vm300, %v573, %v577
      %v579 = vshrl.u32 %v279, 16
      %v581 = vrot.slane %v579, 4
      %v582 = vor.u32 %v581, %v577
      %v583 = vrot.slane %v582, 4
      %v585 = vshll.u32 %v295, 16
      %v587 = vrot.slane %v585, 5
      %v588 = vsel %vm300, %v583, %v587
      %v590 = vshrl.u32 %v280, 16
      %v592 = vrot.slane %v590, 4
      %v593 = vshll.u32 %v280, 16
      %v595 = vrot.slane %v593, 5
      %v596 = vor.u32 %v592, %v595
      %v597 = vrot.slane %v596, 4
      %v599 = vshll.u32 %v281, 16
      %v601 = vrot.slane %v599, 5
      %v602 = vsel %vm300, %v597, %v601
      %v603 = vshrl.u32 %v281, 16
      %v605 = vrot.slane %v603, 4
      %v606 = vor.u32 %v605, %v601
      %v607 = vrot.slane %v606, 4
      %v609 = vshll.u32 %v296, 16
      %v611 = vrot.slane %v609, 5
      %v612 = vsel %vm300, %v607, %v611
      %v614 = vshrl.u32 %v282, 16
      %v616 = vrot.slane %v614, 4
      %v617 = vshll.u32 %v282, 16
      %v619 = vrot.slane %v617, 5
      %v620 = vor.u32 %v616, %v619
      %v621 = vrot.slane %v620, 4
      %v623 = vshll.u32 %v283, 16
      %v625 = vrot.slane %v623, 5
      %v626 = vsel %vm300, %v621, %v625
      %v627 = vshrl.u32 %v283, 16
      %v629 = vrot.slane %v627, 4
      %v630 = vor.u32 %v629, %v625
      %v631 = vrot.slane %v630, 4
      %v633 = vshll.u32 %v297, 16
      %v635 = vrot.slane %v633, 5
      %v636 = vsel %vm300, %v631, %v635
      %v637 = vld [vmem:[%s233] sm:$0xe]
      %v638 = vld [vmem:[%s233 + $0xc] sm:$0xe]
      %v639 = vld [vmem:[%s233 + $0x18] sm:$0xe]
      %v640 = vld [vmem:[%s233 + $0x24] sm:$0xe]
      %v641 = vld [vmem:[%s233 + $0x30] sm:$0xe]
      %v642 = vld [vmem:[%s233 + $0x3c] sm:$0xe]
      %v643 = vld [vmem:[%s233 + $0x48] sm:$0xe]
      %v644 = vld [vmem:[%s233 + $0x54] sm:$0xe]
      %v645 = vld [vmem:[%s233 + $0x60] sm:$0xe]
      %v646 = vld [vmem:[%s233 + $0x6c] sm:$0xe]
      %v647 = vld [vmem:[%s233 + $0x78] sm:$0xe]
      %v648 = vld [vmem:[%s233 + $0x84] sm:$0xe]
      %v649 = vld [vmem:[%s233 + $0x90] sm:$0xe]
      %v650 = vld [vmem:[%s233 + $0x9c] sm:$0xe]
      %vm693 = vcmask 1042432
      %vm694 = vcmask 1046532
      %vm695 = vmor %vm693, %vm694
      %v696 = vrot.slane %v637, 5
      %v697 = vrot.slane %v696, 4
      %v698 = vrot.slane %v257, 5
      %v699 = vsel %vm695, %v697, %v698
      %v700 = vrot.slane %v698, 4
      %v701 = vrot.slane %v284, 5
      %v702 = vsel %vm695, %v700, %v701
      %v703 = vrot.slane %v638, 5
      %v704 = vrot.slane %v703, 4
      %v705 = vrot.slane %v259, 5
      %v706 = vsel %vm695, %v704, %v705
      %v707 = vrot.slane %v705, 4
      %v708 = vrot.slane %v285, 5
      %v709 = vsel %vm695, %v707, %v708
      %v710 = vrot.slane %v639, 5
      %v711 = vrot.slane %v710, 4
      %v712 = vrot.slane %v261, 5
      %v713 = vsel %vm695, %v711, %v712
      %v714 = vrot.slane %v712, 4
      %v715 = vrot.slane %v286, 5
      %v716 = vsel %vm695, %v714, %v715
      %v717 = vrot.slane %v640, 5
      %v718 = vrot.slane %v717, 4
      %v719 = vrot.slane %v263, 5
      %v720 = vsel %vm695, %v718, %v719
      %v721 = vrot.slane %v719, 4
      %v722 = vrot.slane %v287, 5
      %v723 = vsel %vm695, %v721, %v722
      %v724 = vrot.slane %v641, 5
      %v725 = vrot.slane %v724, 4
      %v726 = vrot.slane %v265, 5
      %v727 = vsel %vm695, %v725, %v726
      %v728 = vrot.slane %v726, 4
      %v729 = vrot.slane %v288, 5
      %v730 = vsel %vm695, %v728, %v729
      %v731 = vrot.slane %v642, 5
      %v732 = vrot.slane %v731, 4
      %v733 = vrot.slane %v267, 5
      %v734 = vsel %vm695, %v732, %v733
      %v735 = vrot.slane %v733, 4
      %v736 = vrot.slane %v289, 5
      %v737 = vsel %vm695, %v735, %v736
      %v738 = vrot.slane %v643, 5
      %v739 = vrot.slane %v738, 4
      %v740 = vrot.slane %v269, 5
      %v741 = vsel %vm695, %v739, %v740
      %v742 = vrot.slane %v740, 4
      %v743 = vrot.slane %v290, 5
      %v744 = vsel %vm695, %v742, %v743
      %v745 = vrot.slane %v644, 5
      %v746 = vrot.slane %v745, 4
      %v747 = vrot.slane %v271, 5
      %v748 = vsel %vm695, %v746, %v747
      %v749 = vrot.slane %v747, 4
      %v750 = vrot.slane %v291, 5
      %v751 = vsel %vm695, %v749, %v750
      %v752 = vrot.slane %v645, 5
      %v753 = vrot.slane %v752, 4
      %v754 = vrot.slane %v273, 5
      %v755 = vsel %vm695, %v753, %v754
      %v756 = vrot.slane %v754, 4
      %v757 = vrot.slane %v292, 5
      %v758 = vsel %vm695, %v756, %v757
      %v759 = vrot.slane %v646, 5
      %v760 = vrot.slane %v759, 4
      %v761 = vrot.slane %v275, 5
      %v762 = vsel %vm695, %v760, %v761
      %v763 = vrot.slane %v761, 4
      %v764 = vrot.slane %v293, 5
      %v765 = vsel %vm695, %v763, %v764
      %v766 = vrot.slane %v647, 5
      %v767 = vrot.slane %v766, 4
      %v768 = vrot.slane %v277, 5
      %v769 = vsel %vm695, %v767, %v768
      %v770 = vrot.slane %v768, 4
      %v771 = vrot.slane %v294, 5
      %v772 = vsel %vm695, %v770, %v771
      %v773 = vrot.slane %v648, 5
      %v774 = vrot.slane %v773, 4
      %v775 = vrot.slane %v279, 5
      %v776 = vsel %vm695, %v774, %v775
      %v777 = vrot.slane %v775, 4
      %v778 = vrot.slane %v295, 5
      %v779 = vsel %vm695, %v777, %v778
      %v780 = vrot.slane %v649, 5
      %v781 = vrot.slane %v780, 4
      %v782 = vrot.slane %v281, 5
      %v783 = vsel %vm695, %v781, %v782
      %v784 = vrot.slane %v782, 4
      %v785 = vrot.slane %v296, 5
      %v786 = vsel %vm695, %v784, %v785
      %v787 = vrot.slane %v650, 5
      %v788 = vrot.slane %v787, 4
      %v789 = vrot.slane %v283, 5
      %v790 = vsel %vm695, %v788, %v789
      %v791 = vrot.slane %v789, 4
      %v792 = vrot.slane %v297, 5
      %v793 = vsel %vm695, %v791, %v792
      %s794 = scalar_lea.vmem %s233, 12
      %v795 = vld [vmem:[%s794] sm:$0xf]
      %v796 = vld [vmem:[%s794 + $0x4] sm:$0xf]
      %v797 = vld [vmem:[%s794 + $0xc] sm:$0xf]
      %v798 = vld [vmem:[%s794 + $0x10] sm:$0xf]
      %v799 = vld [vmem:[%s794 + $0x18] sm:$0xf]
      %v800 = vld [vmem:[%s794 + $0x1c] sm:$0xf]
      %v801 = vld [vmem:[%s794 + $0x24] sm:$0xf]
      %v802 = vld [vmem:[%s794 + $0x28] sm:$0xf]
      %v803 = vld [vmem:[%s794 + $0x30] sm:$0xf]
      %v804 = vld [vmem:[%s794 + $0x34] sm:$0xf]
      %v805 = vld [vmem:[%s794 + $0x3c] sm:$0xf]
      %v806 = vld [vmem:[%s794 + $0x40] sm:$0xf]
      %v807 = vld [vmem:[%s794 + $0x48] sm:$0xf]
      %v808 = vld [vmem:[%s794 + $0x4c] sm:$0xf]
      %v809 = vld [vmem:[%s794 + $0x54] sm:$0xf]
      %v810 = vld [vmem:[%s794 + $0x58] sm:$0xf]
      %v811 = vld [vmem:[%s794 + $0x60] sm:$0xf]
      %v812 = vld [vmem:[%s794 + $0x64] sm:$0xf]
      %v813 = vld [vmem:[%s794 + $0x6c] sm:$0xf]
      %v814 = vld [vmem:[%s794 + $0x70] sm:$0xf]
      %v815 = vld [vmem:[%s794 + $0x78] sm:$0xf]
      %v816 = vld [vmem:[%s794 + $0x7c] sm:$0xf]
      %v817 = vld [vmem:[%s794 + $0x84] sm:$0xf]
      %v818 = vld [vmem:[%s794 + $0x88] sm:$0xf]
      %v819 = vld [vmem:[%s794 + $0x90] sm:$0xf]
      %v820 = vld [vmem:[%s794 + $0x94] sm:$0xf]
      %v821 = vld [vmem:[%s794 + $0x9c] sm:$0xf]
      %v822 = vld [vmem:[%s794 + $0xa0] sm:$0xf]
      %v823 = vld [vmem:[%s794 + $0x8] sm:$0x1]
      %v824 = vld [vmem:[%s794 + $0x14] sm:$0x1]
      %v825 = vld [vmem:[%s794 + $0x20] sm:$0x1]
      %v826 = vld [vmem:[%s794 + $0x2c] sm:$0x1]
      %v827 = vld [vmem:[%s794 + $0x38] sm:$0x1]
      %v828 = vld [vmem:[%s794 + $0x44] sm:$0x1]
      %v829 = vld [vmem:[%s794 + $0x50] sm:$0x1]
      %v830 = vld [vmem:[%s794 + $0x5c] sm:$0x1]
      %v831 = vld [vmem:[%s794 + $0x68] sm:$0x1]
      %v832 = vld [vmem:[%s794 + $0x74] sm:$0x1]
      %v833 = vld [vmem:[%s794 + $0x80] sm:$0x1]
      %v834 = vld [vmem:[%s794 + $0x8c] sm:$0x1]
      %v835 = vld [vmem:[%s794 + $0x98] sm:$0x1]
      %v836 = vld [vmem:[%s794 + $0xa4] sm:$0x1]
      %v838 = vshrl.u32 %v795, 16
      %v840 = vrot.slane %v838, 4
      %v841 = vshll.u32 %v795, 16
      %v843 = vrot.slane %v841, 5
      %v844 = vor.u32 %v840, %v843
      %v845 = vrot.slane %v844, 4
      %v847 = vshll.u32 %v796, 16
      %v849 = vrot.slane %v847, 5
      %v850 = vsel %vm300, %v845, %v849
      %v851 = vshrl.u32 %v796, 16
      %v853 = vrot.slane %v851, 4
      %v854 = vor.u32 %v853, %v849
      %v855 = vrot.slane %v854, 4
      %v857 = vshll.u32 %v823, 16
      %v859 = vrot.slane %v857, 5
      %v860 = vsel %vm300, %v855, %v859
      %v862 = vshrl.u32 %v797, 16
      %v864 = vrot.slane %v862, 4
      %v865 = vshll.u32 %v797, 16
      %v867 = vrot.slane %v865, 5
      %v868 = vor.u32 %v864, %v867
      %v869 = vrot.slane %v868, 4
      %v871 = vshll.u32 %v798, 16
      %v873 = vrot.slane %v871, 5
      %v874 = vsel %vm300, %v869, %v873
      %v875 = vshrl.u32 %v798, 16
      %v877 = vrot.slane %v875, 4
      %v878 = vor.u32 %v877, %v873
      %v879 = vrot.slane %v878, 4
      %v881 = vshll.u32 %v824, 16
      %v883 = vrot.slane %v881, 5
      %v884 = vsel %vm300, %v879, %v883
      %v886 = vshrl.u32 %v799, 16
      %v888 = vrot.slane %v886, 4
      %v889 = vshll.u32 %v799, 16
      %v891 = vrot.slane %v889, 5
      %v892 = vor.u32 %v888, %v891
      %v893 = vrot.slane %v892, 4
      %v895 = vshll.u32 %v800, 16
      %v897 = vrot.slane %v895, 5
      %v898 = vsel %vm300, %v893, %v897
      %v899 = vshrl.u32 %v800, 16
      %v901 = vrot.slane %v899, 4
      %v902 = vor.u32 %v901, %v897
      %v903 = vrot.slane %v902, 4
      %v905 = vshll.u32 %v825, 16
      %v907 = vrot.slane %v905, 5
      %v908 = vsel %vm300, %v903, %v907
      %v910 = vshrl.u32 %v801, 16
      %v912 = vrot.slane %v910, 4
      %v913 = vshll.u32 %v801, 16
      %v915 = vrot.slane %v913, 5
      %v916 = vor.u32 %v912, %v915
      %v917 = vrot.slane %v916, 4
      %v919 = vshll.u32 %v802, 16
      %v921 = vrot.slane %v919, 5
      %v922 = vsel %vm300, %v917, %v921
      %v923 = vshrl.u32 %v802, 16
      %v925 = vrot.slane %v923, 4
      %v926 = vor.u32 %v925, %v921
      %v927 = vrot.slane %v926, 4
      %v929 = vshll.u32 %v826, 16
      %v931 = vrot.slane %v929, 5
      %v932 = vsel %vm300, %v927, %v931
      %v934 = vshrl.u32 %v803, 16
      %v936 = vrot.slane %v934, 4
      %v937 = vshll.u32 %v803, 16
      %v939 = vrot.slane %v937, 5
      %v940 = vor.u32 %v936, %v939
      %v941 = vrot.slane %v940, 4
      %v943 = vshll.u32 %v804, 16
      %v945 = vrot.slane %v943, 5
      %v946 = vsel %vm300, %v941, %v945
      %v947 = vshrl.u32 %v804, 16
      %v949 = vrot.slane %v947, 4
      %v950 = vor.u32 %v949, %v945
      %v951 = vrot.slane %v950, 4
      %v953 = vshll.u32 %v827, 16
      %v955 = vrot.slane %v953, 5
      %v956 = vsel %vm300, %v951, %v955
      %v958 = vshrl.u32 %v805, 16
      %v960 = vrot.slane %v958, 4
      %v961 = vshll.u32 %v805, 16
      %v963 = vrot.slane %v961, 5
      %v964 = vor.u32 %v960, %v963
      %v965 = vrot.slane %v964, 4
      %v967 = vshll.u32 %v806, 16
      %v969 = vrot.slane %v967, 5
      %v970 = vsel %vm300, %v965, %v969
      %v971 = vshrl.u32 %v806, 16
      %v973 = vrot.slane %v971, 4
      %v974 = vor.u32 %v973, %v969
      %v975 = vrot.slane %v974, 4
      %v977 = vshll.u32 %v828, 16
      %v979 = vrot.slane %v977, 5
      %v980 = vsel %vm300, %v975, %v979
      %v982 = vshrl.u32 %v807, 16
      %v984 = vrot.slane %v982, 4
      %v985 = vshll.u32 %v807, 16
      %v987 = vrot.slane %v985, 5
      %v988 = vor.u32 %v984, %v987
      %v989 = vrot.slane %v988, 4
      %v991 = vshll.u32 %v808, 16
      %v993 = vrot.slane %v991, 5
      %v994 = vsel %vm300, %v989, %v993
      %v995 = vshrl.u32 %v808, 16
      %v997 = vrot.slane %v995, 4
      %v998 = vor.u32 %v997, %v993
      %v999 = vrot.slane %v998, 4
      %v1001 = vshll.u32 %v829, 16
      %v1003 = vrot.slane %v1001, 5
      %v1004 = vsel %vm300, %v999, %v1003
      %v1006 = vshrl.u32 %v809, 16
      %v1008 = vrot.slane %v1006, 4
      %v1009 = vshll.u32 %v809, 16
      %v1011 = vrot.slane %v1009, 5
      %v1012 = vor.u32 %v1008, %v1011
      %v1013 = vrot.slane %v1012, 4
      %v1015 = vshll.u32 %v810, 16
      %v1017 = vrot.slane %v1015, 5
      %v1018 = vsel %vm300, %v1013, %v1017
      %v1019 = vshrl.u32 %v810, 16
      %v1021 = vrot.slane %v1019, 4
      %v1022 = vor.u32 %v1021, %v1017
      %v1023 = vrot.slane %v1022, 4
      %v1025 = vshll.u32 %v830, 16
      %v1027 = vrot.slane %v1025, 5
      %v1028 = vsel %vm300, %v1023, %v1027
      %v1030 = vshrl.u32 %v811, 16
      %v1032 = vrot.slane %v1030, 4
      %v1033 = vshll.u32 %v811, 16
      %v1035 = vrot.slane %v1033, 5
      %v1036 = vor.u32 %v1032, %v1035
      %v1037 = vrot.slane %v1036, 4
      %v1039 = vshll.u32 %v812, 16
      %v1041 = vrot.slane %v1039, 5
      %v1042 = vsel %vm300, %v1037, %v1041
      %v1043 = vshrl.u32 %v812, 16
      %v1045 = vrot.slane %v1043, 4
      %v1046 = vor.u32 %v1045, %v1041
      %v1047 = vrot.slane %v1046, 4
      %v1049 = vshll.u32 %v831, 16
      %v1051 = vrot.slane %v1049, 5
      %v1052 = vsel %vm300, %v1047, %v1051
      %v1054 = vshrl.u32 %v813, 16
      %v1056 = vrot.slane %v1054, 4
      %v1057 = vshll.u32 %v813, 16
      %v1059 = vrot.slane %v1057, 5
      %v1060 = vor.u32 %v1056, %v1059
      %v1061 = vrot.slane %v1060, 4
      %v1063 = vshll.u32 %v814, 16
      %v1065 = vrot.slane %v1063, 5
      %v1066 = vsel %vm300, %v1061, %v1065
      %v1067 = vshrl.u32 %v814, 16
      %v1069 = vrot.slane %v1067, 4
      %v1070 = vor.u32 %v1069, %v1065
      %v1071 = vrot.slane %v1070, 4
      %v1073 = vshll.u32 %v832, 16
      %v1075 = vrot.slane %v1073, 5
      %v1076 = vsel %vm300, %v1071, %v1075
      %v1078 = vshrl.u32 %v815, 16
      %v1080 = vrot.slane %v1078, 4
      %v1081 = vshll.u32 %v815, 16
      %v1083 = vrot.slane %v1081, 5
      %v1084 = vor.u32 %v1080, %v1083
      %v1085 = vrot.slane %v1084, 4
      %v1087 = vshll.u32 %v816, 16
      %v1089 = vrot.slane %v1087, 5
      %v1090 = vsel %vm300, %v1085, %v1089
      %v1091 = vshrl.u32 %v816, 16
      %v1093 = vrot.slane %v1091, 4
      %v1094 = vor.u32 %v1093, %v1089
      %v1095 = vrot.slane %v1094, 4
      %v1097 = vshll.u32 %v833, 16
      %v1099 = vrot.slane %v1097, 5
      %v1100 = vsel %vm300, %v1095, %v1099
      %v1102 = vshrl.u32 %v817, 16
      %v1104 = vrot.slane %v1102, 4
      %v1105 = vshll.u32 %v817, 16
      %v1107 = vrot.slane %v1105, 5
      %v1108 = vor.u32 %v1104, %v1107
      %v1109 = vrot.slane %v1108, 4
      %v1111 = vshll.u32 %v818, 16
      %v1113 = vrot.slane %v1111, 5
      %v1114 = vsel %vm300, %v1109, %v1113
      %v1115 = vshrl.u32 %v818, 16
      %v1117 = vrot.slane %v1115, 4
      %v1118 = vor.u32 %v1117, %v1113
      %v1119 = vrot.slane %v1118, 4
      %v1121 = vshll.u32 %v834, 16
      %v1123 = vrot.slane %v1121, 5
      %v1124 = vsel %vm300, %v1119, %v1123
      %v1126 = vshrl.u32 %v819, 16
      %v1128 = vrot.slane %v1126, 4
      %v1129 = vshll.u32 %v819, 16
      %v1131 = vrot.slane %v1129, 5
      %v1132 = vor.u32 %v1128, %v1131
      %v1133 = vrot.slane %v1132, 4
      %v1135 = vshll.u32 %v820, 16
      %v1137 = vrot.slane %v1135, 5
      %v1138 = vsel %vm300, %v1133, %v1137
      %v1139 = vshrl.u32 %v820, 16
      %v1141 = vrot.slane %v1139, 4
      %v1142 = vor.u32 %v1141, %v1137
      %v1143 = vrot.slane %v1142, 4
      %v1145 = vshll.u32 %v835, 16
      %v1147 = vrot.slane %v1145, 5
      %v1148 = vsel %vm300, %v1143, %v1147
      %v1150 = vshrl.u32 %v821, 16
      %v1152 = vrot.slane %v1150, 4
      %v1153 = vshll.u32 %v821, 16
      %v1155 = vrot.slane %v1153, 5
      %v1156 = vor.u32 %v1152, %v1155
      %v1157 = vrot.slane %v1156, 4
      %v1159 = vshll.u32 %v822, 16
      %v1161 = vrot.slane %v1159, 5
      %v1162 = vsel %vm300, %v1157, %v1161
      %v1163 = vshrl.u32 %v822, 16
      %v1165 = vrot.slane %v1163, 4
      %v1166 = vor.u32 %v1165, %v1161
      %v1167 = vrot.slane %v1166, 4
      %v1169 = vshll.u32 %v836, 16
      %v1171 = vrot.slane %v1169, 5
      %v1172 = vsel %vm300, %v1167, %v1171
      %v1173 = vld [vmem:[%s794] sm:$0xe]
      %v1174 = vld [vmem:[%s794 + $0xc] sm:$0xe]
      %v1175 = vld [vmem:[%s794 + $0x18] sm:$0xe]
      %v1176 = vld [vmem:[%s794 + $0x24] sm:$0xe]
      %v1177 = vld [vmem:[%s794 + $0x30] sm:$0xe]
      %v1178 = vld [vmem:[%s794 + $0x3c] sm:$0xe]
      %v1179 = vld [vmem:[%s794 + $0x48] sm:$0xe]
      %v1180 = vld [vmem:[%s794 + $0x54] sm:$0xe]
      %v1181 = vld [vmem:[%s794 + $0x60] sm:$0xe]
      %v1182 = vld [vmem:[%s794 + $0x6c] sm:$0xe]
      %v1183 = vld [vmem:[%s794 + $0x78] sm:$0xe]
      %v1184 = vld [vmem:[%s794 + $0x84] sm:$0xe]
      %v1185 = vld [vmem:[%s794 + $0x90] sm:$0xe]
      %v1186 = vld [vmem:[%s794 + $0x9c] sm:$0xe]
      %v1229 = vrot.slane %v1173, 5
      %v1230 = vrot.slane %v1229, 4
      %v1231 = vrot.slane %v796, 5
      %v1232 = vsel %vm695, %v1230, %v1231
      %v1233 = vrot.slane %v1231, 4
      %v1234 = vrot.slane %v823, 5
      %v1235 = vsel %vm695, %v1233, %v1234
      %v1236 = vrot.slane %v1174, 5
      %v1237 = vrot.slane %v1236, 4
      %v1238 = vrot.slane %v798, 5
      %v1239 = vsel %vm695, %v1237, %v1238
      %v1240 = vrot.slane %v1238, 4
      %v1241 = vrot.slane %v824, 5
      %v1242 = vsel %vm695, %v1240, %v1241
      %v1243 = vrot.slane %v1175, 5
      %v1244 = vrot.slane %v1243, 4
      %v1245 = vrot.slane %v800, 5
      %v1246 = vsel %vm695, %v1244, %v1245
      %v1247 = vrot.slane %v1245, 4
      %v1248 = vrot.slane %v825, 5
      %v1249 = vsel %vm695, %v1247, %v1248
      %v1250 = vrot.slane %v1176, 5
      %v1251 = vrot.slane %v1250, 4
      %v1252 = vrot.slane %v802, 5
      %v1253 = vsel %vm695, %v1251, %v1252
      %v1254 = vrot.slane %v1252, 4
      %v1255 = vrot.slane %v826, 5
      %v1256 = vsel %vm695, %v1254, %v1255
      %v1257 = vrot.slane %v1177, 5
      %v1258 = vrot.slane %v1257, 4
      %v1259 = vrot.slane %v804, 5
      %v1260 = vsel %vm695, %v1258, %v1259
      %v1261 = vrot.slane %v1259, 4
      %v1262 = vrot.slane %v827, 5
      %v1263 = vsel %vm695, %v1261, %v1262
      %v1264 = vrot.slane %v1178, 5
      %v1265 = vrot.slane %v1264, 4
      %v1266 = vrot.slane %v806, 5
      %v1267 = vsel %vm695, %v1265, %v1266
      %v1268 = vrot.slane %v1266, 4
      %v1269 = vrot.slane %v828, 5
      %v1270 = vsel %vm695, %v1268, %v1269
      %v1271 = vrot.slane %v1179, 5
      %v1272 = vrot.slane %v1271, 4
      %v1273 = vrot.slane %v808, 5
      %v1274 = vsel %vm695, %v1272, %v1273
      %v1275 = vrot.slane %v1273, 4
      %v1276 = vrot.slane %v829, 5
      %v1277 = vsel %vm695, %v1275, %v1276
      %v1278 = vrot.slane %v1180, 5
      %v1279 = vrot.slane %v1278, 4
      %v1280 = vrot.slane %v810, 5
      %v1281 = vsel %vm695, %v1279, %v1280
      %v1282 = vrot.slane %v1280, 4
      %v1283 = vrot.slane %v830, 5
      %v1284 = vsel %vm695, %v1282, %v1283
      %v1285 = vrot.slane %v1181, 5
      %v1286 = vrot.slane %v1285, 4
      %v1287 = vrot.slane %v812, 5
      %v1288 = vsel %vm695, %v1286, %v1287
      %v1289 = vrot.slane %v1287, 4
      %v1290 = vrot.slane %v831, 5
      %v1291 = vsel %vm695, %v1289, %v1290
      %v1292 = vrot.slane %v1182, 5
      %v1293 = vrot.slane %v1292, 4
      %v1294 = vrot.slane %v814, 5
      %v1295 = vsel %vm695, %v1293, %v1294
      %v1296 = vrot.slane %v1294, 4
      %v1297 = vrot.slane %v832, 5
      %v1298 = vsel %vm695, %v1296, %v1297
      %v1299 = vrot.slane %v1183, 5
      %v1300 = vrot.slane %v1299, 4
      %v1301 = vrot.slane %v816, 5
      %v1302 = vsel %vm695, %v1300, %v1301
      %v1303 = vrot.slane %v1301, 4
      %v1304 = vrot.slane %v833, 5
      %v1305 = vsel %vm695, %v1303, %v1304
      %v1306 = vrot.slane %v1184, 5
      %v1307 = vrot.slane %v1306, 4
      %v1308 = vrot.slane %v818, 5
      %v1309 = vsel %vm695, %v1307, %v1308
      %v1310 = vrot.slane %v1308, 4
      %v1311 = vrot.slane %v834, 5
      %v1312 = vsel %vm695, %v1310, %v1311
      %v1313 = vrot.slane %v1185, 5
      %v1314 = vrot.slane %v1313, 4
      %v1315 = vrot.slane %v820, 5
      %v1316 = vsel %vm695, %v1314, %v1315
      %v1317 = vrot.slane %v1315, 4
      %v1318 = vrot.slane %v835, 5
      %v1319 = vsel %vm695, %v1317, %v1318
      %v1320 = vrot.slane %v1186, 5
      %v1321 = vrot.slane %v1320, 4
      %v1322 = vrot.slane %v822, 5
      %v1323 = vsel %vm695, %v1321, %v1322
      %v1324 = vrot.slane %v1322, 4
      %v1325 = vrot.slane %v836, 5
      %v1326 = vsel %vm695, %v1324, %v1325
      %s1327 = scalar_lea.vmem %s233, 24
      %v1328 = vld [vmem:[%s1327] sm:$0xf]
      %v1329 = vld [vmem:[%s1327 + $0x4] sm:$0xf]
      %v1330 = vld [vmem:[%s1327 + $0xc] sm:$0xf]
      %v1331 = vld [vmem:[%s1327 + $0x10] sm:$0xf]
      %v1332 = vld [vmem:[%s1327 + $0x18] sm:$0xf]
      %v1333 = vld [vmem:[%s1327 + $0x1c] sm:$0xf]
      %v1334 = vld [vmem:[%s1327 + $0x24] sm:$0xf]
      %v1335 = vld [vmem:[%s1327 + $0x28] sm:$0xf]
      %v1336 = vld [vmem:[%s1327 + $0x30] sm:$0xf]
      %v1337 = vld [vmem:[%s1327 + $0x34] sm:$0xf]
      %v1338 = vld [vmem:[%s1327 + $0x3c] sm:$0xf]
      %v1339 = vld [vmem:[%s1327 + $0x40] sm:$0xf]
      %v1340 = vld [vmem:[%s1327 + $0x48] sm:$0xf]
      %v1341 = vld [vmem:[%s1327 + $0x4c] sm:$0xf]
      %v1342 = vld [vmem:[%s1327 + $0x54] sm:$0xf]
      %v1343 = vld [vmem:[%s1327 + $0x58] sm:$0xf]
      %v1344 = vld [vmem:[%s1327 + $0x60] sm:$0xf]
      %v1345 = vld [vmem:[%s1327 + $0x64] sm:$0xf]
      %v1346 = vld [vmem:[%s1327 + $0x6c] sm:$0xf]
      %v1347 = vld [vmem:[%s1327 + $0x70] sm:$0xf]
      %v1348 = vld [vmem:[%s1327 + $0x78] sm:$0xf]
      %v1349 = vld [vmem:[%s1327 + $0x7c] sm:$0xf]
      %v1350 = vld [vmem:[%s1327 + $0x84] sm:$0xf]
      %v1351 = vld [vmem:[%s1327 + $0x88] sm:$0xf]
      %v1352 = vld [vmem:[%s1327 + $0x90] sm:$0xf]
      %v1353 = vld [vmem:[%s1327 + $0x94] sm:$0xf]
      %v1354 = vld [vmem:[%s1327 + $0x9c] sm:$0xf]
      %v1355 = vld [vmem:[%s1327 + $0xa0] sm:$0xf]
      %v1356 = vld [vmem:[%s1327 + $0x8] sm:$0x1]
      %v1357 = vld [vmem:[%s1327 + $0x14] sm:$0x1]
      %v1358 = vld [vmem:[%s1327 + $0x20] sm:$0x1]
      %v1359 = vld [vmem:[%s1327 + $0x2c] sm:$0x1]
      %v1360 = vld [vmem:[%s1327 + $0x38] sm:$0x1]
      %v1361 = vld [vmem:[%s1327 + $0x44] sm:$0x1]
      %v1362 = vld [vmem:[%s1327 + $0x50] sm:$0x1]
      %v1363 = vld [vmem:[%s1327 + $0x5c] sm:$0x1]
      %v1364 = vld [vmem:[%s1327 + $0x68] sm:$0x1]
      %v1365 = vld [vmem:[%s1327 + $0x74] sm:$0x1]
      %v1366 = vld [vmem:[%s1327 + $0x80] sm:$0x1]
      %v1367 = vld [vmem:[%s1327 + $0x8c] sm:$0x1]
      %v1368 = vld [vmem:[%s1327 + $0x98] sm:$0x1]
      %v1369 = vld [vmem:[%s1327 + $0xa4] sm:$0x1]
      %v1371 = vshrl.u32 %v1328, 16
      %v1373 = vrot.slane %v1371, 4
      %v1374 = vshll.u32 %v1328, 16
      %v1376 = vrot.slane %v1374, 5
      %v1377 = vor.u32 %v1373, %v1376
      %v1378 = vrot.slane %v1377, 4
      %v1380 = vshll.u32 %v1329, 16
      %v1382 = vrot.slane %v1380, 5
      %v1383 = vsel %vm300, %v1378, %v1382
      %v1384 = vshrl.u32 %v1329, 16
      %v1386 = vrot.slane %v1384, 4
      %v1387 = vor.u32 %v1386, %v1382
      %v1388 = vrot.slane %v1387, 4
      %v1390 = vshll.u32 %v1356, 16
      %v1392 = vrot.slane %v1390, 5
      %v1393 = vsel %vm300, %v1388, %v1392
      %v1395 = vshrl.u32 %v1330, 16
      %v1397 = vrot.slane %v1395, 4
      %v1398 = vshll.u32 %v1330, 16
      %v1400 = vrot.slane %v1398, 5
      %v1401 = vor.u32 %v1397, %v1400
      %v1402 = vrot.slane %v1401, 4
      %v1404 = vshll.u32 %v1331, 16
      %v1406 = vrot.slane %v1404, 5
      %v1407 = vsel %vm300, %v1402, %v1406
      %v1408 = vshrl.u32 %v1331, 16
      %v1410 = vrot.slane %v1408, 4
      %v1411 = vor.u32 %v1410, %v1406
      %v1412 = vrot.slane %v1411, 4
      %v1414 = vshll.u32 %v1357, 16
      %v1416 = vrot.slane %v1414, 5
      %v1417 = vsel %vm300, %v1412, %v1416
      %v1419 = vshrl.u32 %v1332, 16
      %v1421 = vrot.slane %v1419, 4
      %v1422 = vshll.u32 %v1332, 16
      %v1424 = vrot.slane %v1422, 5
      %v1425 = vor.u32 %v1421, %v1424
      %v1426 = vrot.slane %v1425, 4
      %v1428 = vshll.u32 %v1333, 16
      %v1430 = vrot.slane %v1428, 5
      %v1431 = vsel %vm300, %v1426, %v1430
      %v1432 = vshrl.u32 %v1333, 16
      %v1434 = vrot.slane %v1432, 4
      %v1435 = vor.u32 %v1434, %v1430
      %v1436 = vrot.slane %v1435, 4
      %v1438 = vshll.u32 %v1358, 16
      %v1440 = vrot.slane %v1438, 5
      %v1441 = vsel %vm300, %v1436, %v1440
      %v1443 = vshrl.u32 %v1334, 16
      %v1445 = vrot.slane %v1443, 4
      %v1446 = vshll.u32 %v1334, 16
      %v1448 = vrot.slane %v1446, 5
      %v1449 = vor.u32 %v1445, %v1448
      %v1450 = vrot.slane %v1449, 4
      %v1452 = vshll.u32 %v1335, 16
      %v1454 = vrot.slane %v1452, 5
      %v1455 = vsel %vm300, %v1450, %v1454
      %v1456 = vshrl.u32 %v1335, 16
      %v1458 = vrot.slane %v1456, 4
      %v1459 = vor.u32 %v1458, %v1454
      %v1460 = vrot.slane %v1459, 4
      %v1462 = vshll.u32 %v1359, 16
      %v1464 = vrot.slane %v1462, 5
      %v1465 = vsel %vm300, %v1460, %v1464
      %v1467 = vshrl.u32 %v1336, 16
      %v1469 = vrot.slane %v1467, 4
      %v1470 = vshll.u32 %v1336, 16
      %v1472 = vrot.slane %v1470, 5
      %v1473 = vor.u32 %v1469, %v1472
      %v1474 = vrot.slane %v1473, 4
      %v1476 = vshll.u32 %v1337, 16
      %v1478 = vrot.slane %v1476, 5
      %v1479 = vsel %vm300, %v1474, %v1478
      %v1480 = vshrl.u32 %v1337, 16
      %v1482 = vrot.slane %v1480, 4
      %v1483 = vor.u32 %v1482, %v1478
      %v1484 = vrot.slane %v1483, 4
      %v1486 = vshll.u32 %v1360, 16
      %v1488 = vrot.slane %v1486, 5
      %v1489 = vsel %vm300, %v1484, %v1488
      %v1491 = vshrl.u32 %v1338, 16
      %v1493 = vrot.slane %v1491, 4
      %v1494 = vshll.u32 %v1338, 16
      %v1496 = vrot.slane %v1494, 5
      %v1497 = vor.u32 %v1493, %v1496
      %v1498 = vrot.slane %v1497, 4
      %v1500 = vshll.u32 %v1339, 16
      %v1502 = vrot.slane %v1500, 5
      %v1503 = vsel %vm300, %v1498, %v1502
      %v1504 = vshrl.u32 %v1339, 16
      %v1506 = vrot.slane %v1504, 4
      %v1507 = vor.u32 %v1506, %v1502
      %v1508 = vrot.slane %v1507, 4
      %v1510 = vshll.u32 %v1361, 16
      %v1512 = vrot.slane %v1510, 5
      %v1513 = vsel %vm300, %v1508, %v1512
      %v1515 = vshrl.u32 %v1340, 16
      %v1517 = vrot.slane %v1515, 4
      %v1518 = vshll.u32 %v1340, 16
      %v1520 = vrot.slane %v1518, 5
      %v1521 = vor.u32 %v1517, %v1520
      %v1522 = vrot.slane %v1521, 4
      %v1524 = vshll.u32 %v1341, 16
      %v1526 = vrot.slane %v1524, 5
      %v1527 = vsel %vm300, %v1522, %v1526
      %v1528 = vshrl.u32 %v1341, 16
      %v1530 = vrot.slane %v1528, 4
      %v1531 = vor.u32 %v1530, %v1526
      %v1532 = vrot.slane %v1531, 4
      %v1534 = vshll.u32 %v1362, 16
      %v1536 = vrot.slane %v1534, 5
      %v1537 = vsel %vm300, %v1532, %v1536
      %v1539 = vshrl.u32 %v1342, 16
      %v1541 = vrot.slane %v1539, 4
      %v1542 = vshll.u32 %v1342, 16
      %v1544 = vrot.slane %v1542, 5
      %v1545 = vor.u32 %v1541, %v1544
      %v1546 = vrot.slane %v1545, 4
      %v1548 = vshll.u32 %v1343, 16
      %v1550 = vrot.slane %v1548, 5
      %v1551 = vsel %vm300, %v1546, %v1550
      %v1552 = vshrl.u32 %v1343, 16
      %v1554 = vrot.slane %v1552, 4
      %v1555 = vor.u32 %v1554, %v1550
      %v1556 = vrot.slane %v1555, 4
      %v1558 = vshll.u32 %v1363, 16
      %v1560 = vrot.slane %v1558, 5
      %v1561 = vsel %vm300, %v1556, %v1560
      %v1563 = vshrl.u32 %v1344, 16
      %v1565 = vrot.slane %v1563, 4
      %v1566 = vshll.u32 %v1344, 16
      %v1568 = vrot.slane %v1566, 5
      %v1569 = vor.u32 %v1565, %v1568
      %v1570 = vrot.slane %v1569, 4
      %v1572 = vshll.u32 %v1345, 16
      %v1574 = vrot.slane %v1572, 5
      %v1575 = vsel %vm300, %v1570, %v1574
      %v1576 = vshrl.u32 %v1345, 16
      %v1578 = vrot.slane %v1576, 4
      %v1579 = vor.u32 %v1578, %v1574
      %v1580 = vrot.slane %v1579, 4
      %v1582 = vshll.u32 %v1364, 16
      %v1584 = vrot.slane %v1582, 5
      %v1585 = vsel %vm300, %v1580, %v1584
      %v1587 = vshrl.u32 %v1346, 16
      %v1589 = vrot.slane %v1587, 4
      %v1590 = vshll.u32 %v1346, 16
      %v1592 = vrot.slane %v1590, 5
      %v1593 = vor.u32 %v1589, %v1592
      %v1594 = vrot.slane %v1593, 4
      %v1596 = vshll.u32 %v1347, 16
      %v1598 = vrot.slane %v1596, 5
      %v1599 = vsel %vm300, %v1594, %v1598
      %v1600 = vshrl.u32 %v1347, 16
      %v1602 = vrot.slane %v1600, 4
      %v1603 = vor.u32 %v1602, %v1598
      %v1604 = vrot.slane %v1603, 4
      %v1606 = vshll.u32 %v1365, 16
      %v1608 = vrot.slane %v1606, 5
      %v1609 = vsel %vm300, %v1604, %v1608
      %v1611 = vshrl.u32 %v1348, 16
      %v1613 = vrot.slane %v1611, 4
      %v1614 = vshll.u32 %v1348, 16
      %v1616 = vrot.slane %v1614, 5
      %v1617 = vor.u32 %v1613, %v1616
      %v1618 = vrot.slane %v1617, 4
      %v1620 = vshll.u32 %v1349, 16
      %v1622 = vrot.slane %v1620, 5
      %v1623 = vsel %vm300, %v1618, %v1622
      %v1624 = vshrl.u32 %v1349, 16
      %v1626 = vrot.slane %v1624, 4
      %v1627 = vor.u32 %v1626, %v1622
      %v1628 = vrot.slane %v1627, 4
      %v1630 = vshll.u32 %v1366, 16
      %v1632 = vrot.slane %v1630, 5
      %v1633 = vsel %vm300, %v1628, %v1632
      %v1635 = vshrl.u32 %v1350, 16
      %v1637 = vrot.slane %v1635, 4
      %v1638 = vshll.u32 %v1350, 16
      %v1640 = vrot.slane %v1638, 5
      %v1641 = vor.u32 %v1637, %v1640
      %v1642 = vrot.slane %v1641, 4
      %v1644 = vshll.u32 %v1351, 16
      %v1646 = vrot.slane %v1644, 5
      %v1647 = vsel %vm300, %v1642, %v1646
      %v1648 = vshrl.u32 %v1351, 16
      %v1650 = vrot.slane %v1648, 4
      %v1651 = vor.u32 %v1650, %v1646
      %v1652 = vrot.slane %v1651, 4
      %v1654 = vshll.u32 %v1367, 16
      %v1656 = vrot.slane %v1654, 5
      %v1657 = vsel %vm300, %v1652, %v1656
      %v1659 = vshrl.u32 %v1352, 16
      %v1661 = vrot.slane %v1659, 4
      %v1662 = vshll.u32 %v1352, 16
      %v1664 = vrot.slane %v1662, 5
      %v1665 = vor.u32 %v1661, %v1664
      %v1666 = vrot.slane %v1665, 4
      %v1668 = vshll.u32 %v1353, 16
      %v1670 = vrot.slane %v1668, 5
      %v1671 = vsel %vm300, %v1666, %v1670
      %v1672 = vshrl.u32 %v1353, 16
      %v1674 = vrot.slane %v1672, 4
      %v1675 = vor.u32 %v1674, %v1670
      %v1676 = vrot.slane %v1675, 4
      %v1678 = vshll.u32 %v1368, 16
      %v1680 = vrot.slane %v1678, 5
      %v1681 = vsel %vm300, %v1676, %v1680
      %v1683 = vshrl.u32 %v1354, 16
      %v1685 = vrot.slane %v1683, 4
      %v1686 = vshll.u32 %v1354, 16
      %v1688 = vrot.slane %v1686, 5
      %v1689 = vor.u32 %v1685, %v1688
      %v1690 = vrot.slane %v1689, 4
      %v1692 = vshll.u32 %v1355, 16
      %v1694 = vrot.slane %v1692, 5
      %v1695 = vsel %vm300, %v1690, %v1694
      %v1696 = vshrl.u32 %v1355, 16
      %v1698 = vrot.slane %v1696, 4
      %v1699 = vor.u32 %v1698, %v1694
      %v1700 = vrot.slane %v1699, 4
      %v1702 = vshll.u32 %v1369, 16
      %v1704 = vrot.slane %v1702, 5
      %v1705 = vsel %vm300, %v1700, %v1704
      %v1706 = vld [vmem:[%s1327] sm:$0xe]
      %v1707 = vld [vmem:[%s1327 + $0xc] sm:$0xe]
      %v1708 = vld [vmem:[%s1327 + $0x18] sm:$0xe]
      %v1709 = vld [vmem:[%s1327 + $0x24] sm:$0xe]
      %v1710 = vld [vmem:[%s1327 + $0x30] sm:$0xe]
      %v1711 = vld [vmem:[%s1327 + $0x3c] sm:$0xe]
      %v1712 = vld [vmem:[%s1327 + $0x48] sm:$0xe]
      %v1713 = vld [vmem:[%s1327 + $0x54] sm:$0xe]
      %v1714 = vld [vmem:[%s1327 + $0x60] sm:$0xe]
      %v1715 = vld [vmem:[%s1327 + $0x6c] sm:$0xe]
      %v1716 = vld [vmem:[%s1327 + $0x78] sm:$0xe]
      %v1717 = vld [vmem:[%s1327 + $0x84] sm:$0xe]
      %v1718 = vld [vmem:[%s1327 + $0x90] sm:$0xe]
      %v1719 = vld [vmem:[%s1327 + $0x9c] sm:$0xe]
      %v1762 = vrot.slane %v1706, 5
      %v1763 = vrot.slane %v1762, 4
      %v1764 = vrot.slane %v1329, 5
      %v1765 = vsel %vm695, %v1763, %v1764
      %v1766 = vrot.slane %v1764, 4
      %v1767 = vrot.slane %v1356, 5
      %v1768 = vsel %vm695, %v1766, %v1767
      %v1769 = vrot.slane %v1707, 5
      %v1770 = vrot.slane %v1769, 4
      %v1771 = vrot.slane %v1331, 5
      %v1772 = vsel %vm695, %v1770, %v1771
      %v1773 = vrot.slane %v1771, 4
      %v1774 = vrot.slane %v1357, 5
      %v1775 = vsel %vm695, %v1773, %v1774
      %v1776 = vrot.slane %v1708, 5
      %v1777 = vrot.slane %v1776, 4
      %v1778 = vrot.slane %v1333, 5
      %v1779 = vsel %vm695, %v1777, %v1778
      %v1780 = vrot.slane %v1778, 4
      %v1781 = vrot.slane %v1358, 5
      %v1782 = vsel %vm695, %v1780, %v1781
      %v1783 = vrot.slane %v1709, 5
      %v1784 = vrot.slane %v1783, 4
      %v1785 = vrot.slane %v1335, 5
      %v1786 = vsel %vm695, %v1784, %v1785
      %v1787 = vrot.slane %v1785, 4
      %v1788 = vrot.slane %v1359, 5
      %v1789 = vsel %vm695, %v1787, %v1788
      %v1790 = vrot.slane %v1710, 5
      %v1791 = vrot.slane %v1790, 4
      %v1792 = vrot.slane %v1337, 5
      %v1793 = vsel %vm695, %v1791, %v1792
      %v1794 = vrot.slane %v1792, 4
      %v1795 = vrot.slane %v1360, 5
      %v1796 = vsel %vm695, %v1794, %v1795
      %v1797 = vrot.slane %v1711, 5
      %v1798 = vrot.slane %v1797, 4
      %v1799 = vrot.slane %v1339, 5
      %v1800 = vsel %vm695, %v1798, %v1799
      %v1801 = vrot.slane %v1799, 4
      %v1802 = vrot.slane %v1361, 5
      %v1803 = vsel %vm695, %v1801, %v1802
      %v1804 = vrot.slane %v1712, 5
      %v1805 = vrot.slane %v1804, 4
      %v1806 = vrot.slane %v1341, 5
      %v1807 = vsel %vm695, %v1805, %v1806
      %v1808 = vrot.slane %v1806, 4
      %v1809 = vrot.slane %v1362, 5
      %v1810 = vsel %vm695, %v1808, %v1809
      %v1811 = vrot.slane %v1713, 5
      %v1812 = vrot.slane %v1811, 4
      %v1813 = vrot.slane %v1343, 5
      %v1814 = vsel %vm695, %v1812, %v1813
      %v1815 = vrot.slane %v1813, 4
      %v1816 = vrot.slane %v1363, 5
      %v1817 = vsel %vm695, %v1815, %v1816
      %v1818 = vrot.slane %v1714, 5
      %v1819 = vrot.slane %v1818, 4
      %v1820 = vrot.slane %v1345, 5
      %v1821 = vsel %vm695, %v1819, %v1820
      %v1822 = vrot.slane %v1820, 4
      %v1823 = vrot.slane %v1364, 5
      %v1824 = vsel %vm695, %v1822, %v1823
      %v1825 = vrot.slane %v1715, 5
      %v1826 = vrot.slane %v1825, 4
      %v1827 = vrot.slane %v1347, 5
      %v1828 = vsel %vm695, %v1826, %v1827
      %v1829 = vrot.slane %v1827, 4
      %v1830 = vrot.slane %v1365, 5
      %v1831 = vsel %vm695, %v1829, %v1830
      %v1832 = vrot.slane %v1716, 5
      %v1833 = vrot.slane %v1832, 4
      %v1834 = vrot.slane %v1349, 5
      %v1835 = vsel %vm695, %v1833, %v1834
      %v1836 = vrot.slane %v1834, 4
      %v1837 = vrot.slane %v1366, 5
      %v1838 = vsel %vm695, %v1836, %v1837
      %v1839 = vrot.slane %v1717, 5
      %v1840 = vrot.slane %v1839, 4
      %v1841 = vrot.slane %v1351, 5
      %v1842 = vsel %vm695, %v1840, %v1841
      %v1843 = vrot.slane %v1841, 4
      %v1844 = vrot.slane %v1367, 5
      %v1845 = vsel %vm695, %v1843, %v1844
      %v1846 = vrot.slane %v1718, 5
      %v1847 = vrot.slane %v1846, 4
      %v1848 = vrot.slane %v1353, 5
      %v1849 = vsel %vm695, %v1847, %v1848
      %v1850 = vrot.slane %v1848, 4
      %v1851 = vrot.slane %v1368, 5
      %v1852 = vsel %vm695, %v1850, %v1851
      %v1853 = vrot.slane %v1719, 5
      %v1854 = vrot.slane %v1853, 4
      %v1855 = vrot.slane %v1355, 5
      %v1856 = vsel %vm695, %v1854, %v1855
      %v1857 = vrot.slane %v1855, 4
      %v1858 = vrot.slane %v1369, 5
      %v1859 = vsel %vm695, %v1857, %v1858
      %v1874 = vunpack.c.l.b16 %v256
      %v1875 = vunpack.c.l.b16 %v257
      %v1876 = vunpack.c.l.b16 %v258
      %v1877 = vunpack.c.l.b16 %v259
      %v1878 = vunpack.c.l.b16 %v260
      %v1879 = vunpack.c.l.b16 %v261
      %v1880 = vunpack.c.l.b16 %v262
      %v1881 = vunpack.c.l.b16 %v263
      %v1882 = vunpack.c.l.b16 %v264
      %v1883 = vunpack.c.l.b16 %v265
      %v1884 = vunpack.c.l.b16 %v266
      %v1885 = vunpack.c.l.b16 %v267
      %v1886 = vunpack.c.l.b16 %v268
      %v1887 = vunpack.c.l.b16 %v269
      %v1888 = vunpack.c.l.b16 %v270
      %v1889 = vunpack.c.l.b16 %v271
      %v1890 = vunpack.c.l.b16 %v272
      %v1891 = vunpack.c.l.b16 %v273
      %v1892 = vunpack.c.l.b16 %v274
      %v1893 = vunpack.c.l.b16 %v275
      %v1894 = vunpack.c.l.b16 %v276
      %v1895 = vunpack.c.l.b16 %v277
      %v1896 = vunpack.c.l.b16 %v278
      %v1897 = vunpack.c.l.b16 %v279
      %v1898 = vunpack.c.l.b16 %v280
      %v1899 = vunpack.c.l.b16 %v281
      %v1900 = vunpack.c.l.b16 %v282
      %v1901 = vunpack.c.l.b16 %v283
      %v1902 = vpack.c.b16 %v1875, %v1874
      %v1903 = vpack.c.b16 %v1877, %v1876
      %v1904 = vpack.c.b16 %v1879, %v1878
      %v1905 = vpack.c.b16 %v1881, %v1880
      %v1906 = vpack.c.b16 %v1883, %v1882
      %v1907 = vpack.c.b16 %v1885, %v1884
      %v1908 = vpack.c.b16 %v1887, %v1886
      %v1909 = vpack.c.b16 %v1889, %v1888
      %v1910 = vpack.c.b16 %v1891, %v1890
      %v1911 = vpack.c.b16 %v1893, %v1892
      %v1912 = vpack.c.b16 %v1895, %v1894
      %v1913 = vpack.c.b16 %v1897, %v1896
      %v1914 = vpack.c.b16 %v1899, %v1898
      %v1915 = vpack.c.b16 %v1901, %v1900
      %v1916 = vunpack.c.l.b16 %v314
      %v1917 = vunpack.c.l.b16 %v324
      %v1918 = vunpack.c.l.b16 %v338
      %v1919 = vunpack.c.l.b16 %v348
      %v1920 = vunpack.c.l.b16 %v362
      %v1921 = vunpack.c.l.b16 %v372
      %v1922 = vunpack.c.l.b16 %v386
      %v1923 = vunpack.c.l.b16 %v396
      %v1924 = vunpack.c.l.b16 %v410
      %v1925 = vunpack.c.l.b16 %v420
      %v1926 = vunpack.c.l.b16 %v434
      %v1927 = vunpack.c.l.b16 %v444
      %v1928 = vunpack.c.l.b16 %v458
      %v1929 = vunpack.c.l.b16 %v468
      %v1930 = vunpack.c.l.b16 %v482
      %v1931 = vunpack.c.l.b16 %v492
      %v1932 = vunpack.c.l.b16 %v506
      %v1933 = vunpack.c.l.b16 %v516
      %v1934 = vunpack.c.l.b16 %v530
      %v1935 = vunpack.c.l.b16 %v540
      %v1936 = vunpack.c.l.b16 %v554
      %v1937 = vunpack.c.l.b16 %v564
      %v1938 = vunpack.c.l.b16 %v578
      %v1939 = vunpack.c.l.b16 %v588
      %v1940 = vunpack.c.l.b16 %v602
      %v1941 = vunpack.c.l.b16 %v612
      %v1942 = vunpack.c.l.b16 %v626
      %v1943 = vunpack.c.l.b16 %v636
      %v1944 = vpack.c.b16 %v1917, %v1916
      %v1945 = vpack.c.b16 %v1919, %v1918
      %v1946 = vpack.c.b16 %v1921, %v1920
      %v1947 = vpack.c.b16 %v1923, %v1922
      %v1948 = vpack.c.b16 %v1925, %v1924
      %v1949 = vpack.c.b16 %v1927, %v1926
      %v1950 = vpack.c.b16 %v1929, %v1928
      %v1951 = vpack.c.b16 %v1931, %v1930
      %v1952 = vpack.c.b16 %v1933, %v1932
      %v1953 = vpack.c.b16 %v1935, %v1934
      %v1954 = vpack.c.b16 %v1937, %v1936
      %v1955 = vpack.c.b16 %v1939, %v1938
      %v1956 = vpack.c.b16 %v1941, %v1940
      %v1957 = vpack.c.b16 %v1943, %v1942
      %1958 = vrot.lane.b32.xlu0 %v1944, 4
      %v1959 = vpop.permute.xlu0 %1958
      %1960 = vrot.lane.b32.xlu0 %v1945, 4
      %v1961 = vpop.permute.xlu0 %1960
      %1962 = vrot.lane.b32.xlu0 %v1946, 4
      %v1963 = vpop.permute.xlu0 %1962
      %1964 = vrot.lane.b32.xlu0 %v1947, 4
      %v1965 = vpop.permute.xlu0 %1964
      %1966 = vrot.lane.b32.xlu0 %v1948, 4
      %v1967 = vpop.permute.xlu0 %1966
      %1968 = vrot.lane.b32.xlu0 %v1949, 4
      %v1969 = vpop.permute.xlu0 %1968
      %1970 = vrot.lane.b32.xlu0 %v1950, 4
      %v1971 = vpop.permute.xlu0 %1970
      %1972 = vrot.lane.b32.xlu0 %v1951, 4
      %v1973 = vpop.permute.xlu0 %1972
      %1974 = vrot.lane.b32.xlu0 %v1952, 4
      %v1975 = vpop.permute.xlu0 %1974
      %1976 = vrot.lane.b32.xlu0 %v1953, 4
      %v1977 = vpop.permute.xlu0 %1976
      %1978 = vrot.lane.b32.xlu0 %v1954, 4
      %v1979 = vpop.permute.xlu0 %1978
      %1980 = vrot.lane.b32.xlu0 %v1955, 4
      %v1981 = vpop.permute.xlu0 %1980
      %1982 = vrot.lane.b32.xlu0 %v1956, 4
      %v1983 = vpop.permute.xlu0 %1982
      %1984 = vrot.lane.b32.xlu0 %v1957, 4
      %v1985 = vpop.permute.xlu0 %1984
      %v1986 = vunpack.c.l.b16 %v699
      %v1987 = vunpack.c.l.b16 %v702
      %v1988 = vunpack.c.l.b16 %v706
      %v1989 = vunpack.c.l.b16 %v709
      %v1990 = vunpack.c.l.b16 %v713
      %v1991 = vunpack.c.l.b16 %v716
      %v1992 = vunpack.c.l.b16 %v720
      %v1993 = vunpack.c.l.b16 %v723
      %v1994 = vunpack.c.l.b16 %v727
      %v1995 = vunpack.c.l.b16 %v730
      %v1996 = vunpack.c.l.b16 %v734
      %v1997 = vunpack.c.l.b16 %v737
      %v1998 = vunpack.c.l.b16 %v741
      %v1999 = vunpack.c.l.b16 %v744
      %v2000 = vunpack.c.l.b16 %v748
      %v2001 = vunpack.c.l.b16 %v751
      %v2002 = vunpack.c.l.b16 %v755
      %v2003 = vunpack.c.l.b16 %v758
      %v2004 = vunpack.c.l.b16 %v762
      %v2005 = vunpack.c.l.b16 %v765
      %v2006 = vunpack.c.l.b16 %v769
      %v2007 = vunpack.c.l.b16 %v772
      %v2008 = vunpack.c.l.b16 %v776
      %v2009 = vunpack.c.l.b16 %v779
      %v2010 = vunpack.c.l.b16 %v783
      %v2011 = vunpack.c.l.b16 %v786
      %v2012 = vunpack.c.l.b16 %v790
      %v2013 = vunpack.c.l.b16 %v793
      %v2014 = vpack.c.b16 %v1987, %v1986
      %v2015 = vpack.c.b16 %v1989, %v1988
      %v2016 = vpack.c.b16 %v1991, %v1990
      %v2017 = vpack.c.b16 %v1993, %v1992
      %v2018 = vpack.c.b16 %v1995, %v1994
      %v2019 = vpack.c.b16 %v1997, %v1996
      %v2020 = vpack.c.b16 %v1999, %v1998
      %v2021 = vpack.c.b16 %v2001, %v2000
      %v2022 = vpack.c.b16 %v2003, %v2002
      %v2023 = vpack.c.b16 %v2005, %v2004
      %v2024 = vpack.c.b16 %v2007, %v2006
      %v2025 = vpack.c.b16 %v2009, %v2008
      %v2026 = vpack.c.b16 %v2011, %v2010
      %v2027 = vpack.c.b16 %v2013, %v2012
      %2028 = vrot.lane.b32.xlu0 %v2014, 8
      %v2029 = vpop.permute.xlu0 %2028
      %2030 = vrot.lane.b32.xlu0 %v2015, 8
      %v2031 = vpop.permute.xlu0 %2030
      %2032 = vrot.lane.b32.xlu0 %v2016, 8
      %v2033 = vpop.permute.xlu0 %2032
      %2034 = vrot.lane.b32.xlu0 %v2017, 8
      %v2035 = vpop.permute.xlu0 %2034
      %2036 = vrot.lane.b32.xlu0 %v2018, 8
      %v2037 = vpop.permute.xlu0 %2036
      %2038 = vrot.lane.b32.xlu0 %v2019, 8
      %v2039 = vpop.permute.xlu0 %2038
      %2040 = vrot.lane.b32.xlu0 %v2020, 8
      %v2041 = vpop.permute.xlu0 %2040
      %2042 = vrot.lane.b32.xlu0 %v2021, 8
      %v2043 = vpop.permute.xlu0 %2042
      %2044 = vrot.lane.b32.xlu0 %v2022, 8
      %v2045 = vpop.permute.xlu0 %2044
      %2046 = vrot.lane.b32.xlu0 %v2023, 8
      %v2047 = vpop.permute.xlu0 %2046
      %2048 = vrot.lane.b32.xlu0 %v2024, 8
      %v2049 = vpop.permute.xlu0 %2048
      %2050 = vrot.lane.b32.xlu0 %v2025, 8
      %v2051 = vpop.permute.xlu0 %2050
      %2052 = vrot.lane.b32.xlu0 %v2026, 8
      %v2053 = vpop.permute.xlu0 %2052
      %2054 = vrot.lane.b32.xlu0 %v2027, 8
      %v2055 = vpop.permute.xlu0 %2054
      %v2070 = vunpack.c.l.b16 %v795
      %v2071 = vunpack.c.l.b16 %v796
      %v2072 = vunpack.c.l.b16 %v797
      %v2073 = vunpack.c.l.b16 %v798
      %v2074 = vunpack.c.l.b16 %v799
      %v2075 = vunpack.c.l.b16 %v800
      %v2076 = vunpack.c.l.b16 %v801
      %v2077 = vunpack.c.l.b16 %v802
      %v2078 = vunpack.c.l.b16 %v803
      %v2079 = vunpack.c.l.b16 %v804
      %v2080 = vunpack.c.l.b16 %v805
      %v2081 = vunpack.c.l.b16 %v806
      %v2082 = vunpack.c.l.b16 %v807
      %v2083 = vunpack.c.l.b16 %v808
      %v2084 = vunpack.c.l.b16 %v809
      %v2085 = vunpack.c.l.b16 %v810
      %v2086 = vunpack.c.l.b16 %v811
      %v2087 = vunpack.c.l.b16 %v812
      %v2088 = vunpack.c.l.b16 %v813
      %v2089 = vunpack.c.l.b16 %v814
      %v2090 = vunpack.c.l.b16 %v815
      %v2091 = vunpack.c.l.b16 %v816
      %v2092 = vunpack.c.l.b16 %v817
      %v2093 = vunpack.c.l.b16 %v818
      %v2094 = vunpack.c.l.b16 %v819
      %v2095 = vunpack.c.l.b16 %v820
      %v2096 = vunpack.c.l.b16 %v821
      %v2097 = vunpack.c.l.b16 %v822
      %v2098 = vpack.c.b16 %v2071, %v2070
      %v2099 = vpack.c.b16 %v2073, %v2072
      %v2100 = vpack.c.b16 %v2075, %v2074
      %v2101 = vpack.c.b16 %v2077, %v2076
      %v2102 = vpack.c.b16 %v2079, %v2078
      %v2103 = vpack.c.b16 %v2081, %v2080
      %v2104 = vpack.c.b16 %v2083, %v2082
      %v2105 = vpack.c.b16 %v2085, %v2084
      %v2106 = vpack.c.b16 %v2087, %v2086
      %v2107 = vpack.c.b16 %v2089, %v2088
      %v2108 = vpack.c.b16 %v2091, %v2090
      %v2109 = vpack.c.b16 %v2093, %v2092
      %v2110 = vpack.c.b16 %v2095, %v2094
      %v2111 = vpack.c.b16 %v2097, %v2096
      %2112 = vrot.lane.b32.xlu0 %v2098, 12
      %v2113 = vpop.permute.xlu0 %2112
      %2114 = vrot.lane.b32.xlu0 %v2099, 12
      %v2115 = vpop.permute.xlu0 %2114
      %2116 = vrot.lane.b32.xlu0 %v2100, 12
      %v2117 = vpop.permute.xlu0 %2116
      %2118 = vrot.lane.b32.xlu0 %v2101, 12
      %v2119 = vpop.permute.xlu0 %2118
      %2120 = vrot.lane.b32.xlu0 %v2102, 12
      %v2121 = vpop.permute.xlu0 %2120
      %2122 = vrot.lane.b32.xlu0 %v2103, 12
      %v2123 = vpop.permute.xlu0 %2122
      %2124 = vrot.lane.b32.xlu0 %v2104, 12
      %v2125 = vpop.permute.xlu0 %2124
      %2126 = vrot.lane.b32.xlu0 %v2105, 12
      %v2127 = vpop.permute.xlu0 %2126
      %2128 = vrot.lane.b32.xlu0 %v2106, 12
      %v2129 = vpop.permute.xlu0 %2128
      %2130 = vrot.lane.b32.xlu0 %v2107, 12
      %v2131 = vpop.permute.xlu0 %2130
      %2132 = vrot.lane.b32.xlu0 %v2108, 12
      %v2133 = vpop.permute.xlu0 %2132
      %2134 = vrot.lane.b32.xlu0 %v2109, 12
      %v2135 = vpop.permute.xlu0 %2134
      %2136 = vrot.lane.b32.xlu0 %v2110, 12
      %v2137 = vpop.permute.xlu0 %2136
      %2138 = vrot.lane.b32.xlu0 %v2111, 12
      %v2139 = vpop.permute.xlu0 %2138
      %v2140 = vunpack.c.l.b16 %v850
      %v2141 = vunpack.c.l.b16 %v860
      %v2142 = vunpack.c.l.b16 %v874
      %v2143 = vunpack.c.l.b16 %v884
      %v2144 = vunpack.c.l.b16 %v898
      %v2145 = vunpack.c.l.b16 %v908
      %v2146 = vunpack.c.l.b16 %v922
      %v2147 = vunpack.c.l.b16 %v932
      %v2148 = vunpack.c.l.b16 %v946
      %v2149 = vunpack.c.l.b16 %v956
      %v2150 = vunpack.c.l.b16 %v970
      %v2151 = vunpack.c.l.b16 %v980
      %v2152 = vunpack.c.l.b16 %v994
      %v2153 = vunpack.c.l.b16 %v1004
      %v2154 = vunpack.c.l.b16 %v1018
      %v2155 = vunpack.c.l.b16 %v1028
      %v2156 = vunpack.c.l.b16 %v1042
      %v2157 = vunpack.c.l.b16 %v1052
      %v2158 = vunpack.c.l.b16 %v1066
      %v2159 = vunpack.c.l.b16 %v1076
      %v2160 = vunpack.c.l.b16 %v1090
      %v2161 = vunpack.c.l.b16 %v1100
      %v2162 = vunpack.c.l.b16 %v1114
      %v2163 = vunpack.c.l.b16 %v1124
      %v2164 = vunpack.c.l.b16 %v1138
      %v2165 = vunpack.c.l.b16 %v1148
      %v2166 = vunpack.c.l.b16 %v1162
      %v2167 = vunpack.c.l.b16 %v1172
      %v2168 = vpack.c.b16 %v2141, %v2140
      %v2169 = vpack.c.b16 %v2143, %v2142
      %v2170 = vpack.c.b16 %v2145, %v2144
      %v2171 = vpack.c.b16 %v2147, %v2146
      %v2172 = vpack.c.b16 %v2149, %v2148
      %v2173 = vpack.c.b16 %v2151, %v2150
      %v2174 = vpack.c.b16 %v2153, %v2152
      %v2175 = vpack.c.b16 %v2155, %v2154
      %v2176 = vpack.c.b16 %v2157, %v2156
      %v2177 = vpack.c.b16 %v2159, %v2158
      %v2178 = vpack.c.b16 %v2161, %v2160
      %v2179 = vpack.c.b16 %v2163, %v2162
      %v2180 = vpack.c.b16 %v2165, %v2164
      %v2181 = vpack.c.b16 %v2167, %v2166
      %2182 = vrot.lane.b32.xlu0 %v2168, 16
      %v2183 = vpop.permute.xlu0 %2182
      %2184 = vrot.lane.b32.xlu0 %v2169, 16
      %v2185 = vpop.permute.xlu0 %2184
      %2186 = vrot.lane.b32.xlu0 %v2170, 16
      %v2187 = vpop.permute.xlu0 %2186
      %2188 = vrot.lane.b32.xlu0 %v2171, 16
      %v2189 = vpop.permute.xlu0 %2188
      %2190 = vrot.lane.b32.xlu0 %v2172, 16
      %v2191 = vpop.permute.xlu0 %2190
      %2192 = vrot.lane.b32.xlu0 %v2173, 16
      %v2193 = vpop.permute.xlu0 %2192
      %2194 = vrot.lane.b32.xlu0 %v2174, 16
      %v2195 = vpop.permute.xlu0 %2194
      %2196 = vrot.lane.b32.xlu0 %v2175, 16
      %v2197 = vpop.permute.xlu0 %2196
      %2198 = vrot.lane.b32.xlu0 %v2176, 16
      %v2199 = vpop.permute.xlu0 %2198
      %2200 = vrot.lane.b32.xlu0 %v2177, 16
      %v2201 = vpop.permute.xlu0 %2200
      %2202 = vrot.lane.b32.xlu0 %v2178, 16
      %v2203 = vpop.permute.xlu0 %2202
      %2204 = vrot.lane.b32.xlu0 %v2179, 16
      %v2205 = vpop.permute.xlu0 %2204
      %2206 = vrot.lane.b32.xlu0 %v2180, 16
      %v2207 = vpop.permute.xlu0 %2206
      %2208 = vrot.lane.b32.xlu0 %v2181, 16
      %v2209 = vpop.permute.xlu0 %2208
      %v2210 = vunpack.c.l.b16 %v1232
      %v2211 = vunpack.c.l.b16 %v1235
      %v2212 = vunpack.c.l.b16 %v1239
      %v2213 = vunpack.c.l.b16 %v1242
      %v2214 = vunpack.c.l.b16 %v1246
      %v2215 = vunpack.c.l.b16 %v1249
      %v2216 = vunpack.c.l.b16 %v1253
      %v2217 = vunpack.c.l.b16 %v1256
      %v2218 = vunpack.c.l.b16 %v1260
      %v2219 = vunpack.c.l.b16 %v1263
      %v2220 = vunpack.c.l.b16 %v1267
      %v2221 = vunpack.c.l.b16 %v1270
      %v2222 = vunpack.c.l.b16 %v1274
      %v2223 = vunpack.c.l.b16 %v1277
      %v2224 = vunpack.c.l.b16 %v1281
      %v2225 = vunpack.c.l.b16 %v1284
      %v2226 = vunpack.c.l.b16 %v1288
      %v2227 = vunpack.c.l.b16 %v1291
      %v2228 = vunpack.c.l.b16 %v1295
      %v2229 = vunpack.c.l.b16 %v1298
      %v2230 = vunpack.c.l.b16 %v1302
      %v2231 = vunpack.c.l.b16 %v1305
      %v2232 = vunpack.c.l.b16 %v1309
      %v2233 = vunpack.c.l.b16 %v1312
      %v2234 = vunpack.c.l.b16 %v1316
      %v2235 = vunpack.c.l.b16 %v1319
      %v2236 = vunpack.c.l.b16 %v1323
      %v2237 = vunpack.c.l.b16 %v1326
      %v2238 = vpack.c.b16 %v2211, %v2210
      %v2239 = vpack.c.b16 %v2213, %v2212
      %v2240 = vpack.c.b16 %v2215, %v2214
      %v2241 = vpack.c.b16 %v2217, %v2216
      %v2242 = vpack.c.b16 %v2219, %v2218
      %v2243 = vpack.c.b16 %v2221, %v2220
      %v2244 = vpack.c.b16 %v2223, %v2222
      %v2245 = vpack.c.b16 %v2225, %v2224
      %v2246 = vpack.c.b16 %v2227, %v2226
      %v2247 = vpack.c.b16 %v2229, %v2228
      %v2248 = vpack.c.b16 %v2231, %v2230
      %v2249 = vpack.c.b16 %v2233, %v2232
      %v2250 = vpack.c.b16 %v2235, %v2234
      %v2251 = vpack.c.b16 %v2237, %v2236
      %2252 = vrot.lane.b32.xlu0 %v2238, 20
      %v2253 = vpop.permute.xlu0 %2252
      %2254 = vrot.lane.b32.xlu0 %v2239, 20
      %v2255 = vpop.permute.xlu0 %2254
      %2256 = vrot.lane.b32.xlu0 %v2240, 20
      %v2257 = vpop.permute.xlu0 %2256
      %2258 = vrot.lane.b32.xlu0 %v2241, 20
      %v2259 = vpop.permute.xlu0 %2258
      %2260 = vrot.lane.b32.xlu0 %v2242, 20
      %v2261 = vpop.permute.xlu0 %2260
      %2262 = vrot.lane.b32.xlu0 %v2243, 20
      %v2263 = vpop.permute.xlu0 %2262
      %2264 = vrot.lane.b32.xlu0 %v2244, 20
      %v2265 = vpop.permute.xlu0 %2264
      %2266 = vrot.lane.b32.xlu0 %v2245, 20
      %v2267 = vpop.permute.xlu0 %2266
      %2268 = vrot.lane.b32.xlu0 %v2246, 20
      %v2269 = vpop.permute.xlu0 %2268
      %2270 = vrot.lane.b32.xlu0 %v2247, 20
      %v2271 = vpop.permute.xlu0 %2270
      %2272 = vrot.lane.b32.xlu0 %v2248, 20
      %v2273 = vpop.permute.xlu0 %2272
      %2274 = vrot.lane.b32.xlu0 %v2249, 20
      %v2275 = vpop.permute.xlu0 %2274
      %2276 = vrot.lane.b32.xlu0 %v2250, 20
      %v2277 = vpop.permute.xlu0 %2276
      %2278 = vrot.lane.b32.xlu0 %v2251, 20
      %v2279 = vpop.permute.xlu0 %2278
      %v2294 = vunpack.c.l.b16 %v1328
      %v2295 = vunpack.c.l.b16 %v1329
      %v2296 = vunpack.c.l.b16 %v1330
      %v2297 = vunpack.c.l.b16 %v1331
      %v2298 = vunpack.c.l.b16 %v1332
      %v2299 = vunpack.c.l.b16 %v1333
      %v2300 = vunpack.c.l.b16 %v1334
      %v2301 = vunpack.c.l.b16 %v1335
      %v2302 = vunpack.c.l.b16 %v1336
      %v2303 = vunpack.c.l.b16 %v1337
      %v2304 = vunpack.c.l.b16 %v1338
      %v2305 = vunpack.c.l.b16 %v1339
      %v2306 = vunpack.c.l.b16 %v1340
      %v2307 = vunpack.c.l.b16 %v1341
      %v2308 = vunpack.c.l.b16 %v1342
      %v2309 = vunpack.c.l.b16 %v1343
      %v2310 = vunpack.c.l.b16 %v1344
      %v2311 = vunpack.c.l.b16 %v1345
      %v2312 = vunpack.c.l.b16 %v1346
      %v2313 = vunpack.c.l.b16 %v1347
      %v2314 = vunpack.c.l.b16 %v1348
      %v2315 = vunpack.c.l.b16 %v1349
      %v2316 = vunpack.c.l.b16 %v1350
      %v2317 = vunpack.c.l.b16 %v1351
      %v2318 = vunpack.c.l.b16 %v1352
      %v2319 = vunpack.c.l.b16 %v1353
      %v2320 = vunpack.c.l.b16 %v1354
      %v2321 = vunpack.c.l.b16 %v1355
      %v2322 = vpack.c.b16 %v2295, %v2294
      %v2323 = vpack.c.b16 %v2297, %v2296
      %v2324 = vpack.c.b16 %v2299, %v2298
      %v2325 = vpack.c.b16 %v2301, %v2300
      %v2326 = vpack.c.b16 %v2303, %v2302
      %v2327 = vpack.c.b16 %v2305, %v2304
      %v2328 = vpack.c.b16 %v2307, %v2306
      %v2329 = vpack.c.b16 %v2309, %v2308
      %v2330 = vpack.c.b16 %v2311, %v2310
      %v2331 = vpack.c.b16 %v2313, %v2312
      %v2332 = vpack.c.b16 %v2315, %v2314
      %v2333 = vpack.c.b16 %v2317, %v2316
      %v2334 = vpack.c.b16 %v2319, %v2318
      %v2335 = vpack.c.b16 %v2321, %v2320
      %2336 = vrot.lane.b32.xlu0 %v2322, 24
      %v2337 = vpop.permute.xlu0 %2336
      %2338 = vrot.lane.b32.xlu0 %v2323, 24
      %v2339 = vpop.permute.xlu0 %2338
      %2340 = vrot.lane.b32.xlu0 %v2324, 24
      %v2341 = vpop.permute.xlu0 %2340
      %2342 = vrot.lane.b32.xlu0 %v2325, 24
      %v2343 = vpop.permute.xlu0 %2342
      %2344 = vrot.lane.b32.xlu0 %v2326, 24
      %v2345 = vpop.permute.xlu0 %2344
      %2346 = vrot.lane.b32.xlu0 %v2327, 24
      %v2347 = vpop.permute.xlu0 %2346
      %2348 = vrot.lane.b32.xlu0 %v2328, 24
      %v2349 = vpop.permute.xlu0 %2348
      %2350 = vrot.lane.b32.xlu0 %v2329, 24
      %v2351 = vpop.permute.xlu0 %2350
      %2352 = vrot.lane.b32.xlu0 %v2330, 24
      %v2353 = vpop.permute.xlu0 %2352
      %2354 = vrot.lane.b32.xlu0 %v2331, 24
      %v2355 = vpop.permute.xlu0 %2354
      %2356 = vrot.lane.b32.xlu0 %v2332, 24
      %v2357 = vpop.permute.xlu0 %2356
      %2358 = vrot.lane.b32.xlu0 %v2333, 24
      %v2359 = vpop.permute.xlu0 %2358
      %2360 = vrot.lane.b32.xlu0 %v2334, 24
      %v2361 = vpop.permute.xlu0 %2360
      %2362 = vrot.lane.b32.xlu0 %v2335, 24
      %v2363 = vpop.permute.xlu0 %2362
      %v2364 = vunpack.c.l.b16 %v1383
      %v2365 = vunpack.c.l.b16 %v1393
      %v2366 = vunpack.c.l.b16 %v1407
      %v2367 = vunpack.c.l.b16 %v1417
      %v2368 = vunpack.c.l.b16 %v1431
      %v2369 = vunpack.c.l.b16 %v1441
      %v2370 = vunpack.c.l.b16 %v1455
      %v2371 = vunpack.c.l.b16 %v1465
      %v2372 = vunpack.c.l.b16 %v1479
      %v2373 = vunpack.c.l.b16 %v1489
      %v2374 = vunpack.c.l.b16 %v1503
      %v2375 = vunpack.c.l.b16 %v1513
      %v2376 = vunpack.c.l.b16 %v1527
      %v2377 = vunpack.c.l.b16 %v1537
      %v2378 = vunpack.c.l.b16 %v1551
      %v2379 = vunpack.c.l.b16 %v1561
      %v2380 = vunpack.c.l.b16 %v1575
      %v2381 = vunpack.c.l.b16 %v1585
      %v2382 = vunpack.c.l.b16 %v1599
      %v2383 = vunpack.c.l.b16 %v1609
      %v2384 = vunpack.c.l.b16 %v1623
      %v2385 = vunpack.c.l.b16 %v1633
      %v2386 = vunpack.c.l.b16 %v1647
      %v2387 = vunpack.c.l.b16 %v1657
      %v2388 = vunpack.c.l.b16 %v1671
      %v2389 = vunpack.c.l.b16 %v1681
      %v2390 = vunpack.c.l.b16 %v1695
      %v2391 = vunpack.c.l.b16 %v1705
      %v2392 = vpack.c.b16 %v2365, %v2364
      %v2393 = vpack.c.b16 %v2367, %v2366
      %v2394 = vpack.c.b16 %v2369, %v2368
      %v2395 = vpack.c.b16 %v2371, %v2370
      %v2396 = vpack.c.b16 %v2373, %v2372
      %v2397 = vpack.c.b16 %v2375, %v2374
      %v2398 = vpack.c.b16 %v2377, %v2376
      %v2399 = vpack.c.b16 %v2379, %v2378
      %v2400 = vpack.c.b16 %v2381, %v2380
      %v2401 = vpack.c.b16 %v2383, %v2382
      %v2402 = vpack.c.b16 %v2385, %v2384
      %v2403 = vpack.c.b16 %v2387, %v2386
      %v2404 = vpack.c.b16 %v2389, %v2388
      %v2405 = vpack.c.b16 %v2391, %v2390
      %2406 = vrot.lane.b32.xlu0 %v2392, 28
      %v2407 = vpop.permute.xlu0 %2406
      %2408 = vrot.lane.b32.xlu0 %v2393, 28
      %v2409 = vpop.permute.xlu0 %2408
      %2410 = vrot.lane.b32.xlu0 %v2394, 28
      %v2411 = vpop.permute.xlu0 %2410
      %2412 = vrot.lane.b32.xlu0 %v2395, 28
      %v2413 = vpop.permute.xlu0 %2412
      %2414 = vrot.lane.b32.xlu0 %v2396, 28
      %v2415 = vpop.permute.xlu0 %2414
      %2416 = vrot.lane.b32.xlu0 %v2397, 28
      %v2417 = vpop.permute.xlu0 %2416
      %2418 = vrot.lane.b32.xlu0 %v2398, 28
      %v2419 = vpop.permute.xlu0 %2418
      %2420 = vrot.lane.b32.xlu0 %v2399, 28
      %v2421 = vpop.permute.xlu0 %2420
      %2422 = vrot.lane.b32.xlu0 %v2400, 28
      %v2423 = vpop.permute.xlu0 %2422
      %2424 = vrot.lane.b32.xlu0 %v2401, 28
      %v2425 = vpop.permute.xlu0 %2424
      %2426 = vrot.lane.b32.xlu0 %v2402, 28
      %v2427 = vpop.permute.xlu0 %2426
      %2428 = vrot.lane.b32.xlu0 %v2403, 28
      %v2429 = vpop.permute.xlu0 %2428
      %2430 = vrot.lane.b32.xlu0 %v2404, 28
      %v2431 = vpop.permute.xlu0 %2430
      %2432 = vrot.lane.b32.xlu0 %v2405, 28
      %v2433 = vpop.permute.xlu0 %2432
      %v2434 = vunpack.c.l.b16 %v1765
      %v2435 = vunpack.c.l.b16 %v1768
      %v2436 = vunpack.c.l.b16 %v1772
      %v2437 = vunpack.c.l.b16 %v1775
      %v2438 = vunpack.c.l.b16 %v1779
      %v2439 = vunpack.c.l.b16 %v1782
      %v2440 = vunpack.c.l.b16 %v1786
      %v2441 = vunpack.c.l.b16 %v1789
      %v2442 = vunpack.c.l.b16 %v1793
      %v2443 = vunpack.c.l.b16 %v1796
      %v2444 = vunpack.c.l.b16 %v1800
      %v2445 = vunpack.c.l.b16 %v1803
      %v2446 = vunpack.c.l.b16 %v1807
      %v2447 = vunpack.c.l.b16 %v1810
      %v2448 = vunpack.c.l.b16 %v1814
      %v2449 = vunpack.c.l.b16 %v1817
      %v2450 = vunpack.c.l.b16 %v1821
      %v2451 = vunpack.c.l.b16 %v1824
      %v2452 = vunpack.c.l.b16 %v1828
      %v2453 = vunpack.c.l.b16 %v1831
      %v2454 = vunpack.c.l.b16 %v1835
      %v2455 = vunpack.c.l.b16 %v1838
      %v2456 = vunpack.c.l.b16 %v1842
      %v2457 = vunpack.c.l.b16 %v1845
      %v2458 = vunpack.c.l.b16 %v1849
      %v2459 = vunpack.c.l.b16 %v1852
      %v2460 = vunpack.c.l.b16 %v1856
      %v2461 = vunpack.c.l.b16 %v1859
      %v2462 = vpack.c.b16 %v2435, %v2434
      %v2463 = vpack.c.b16 %v2437, %v2436
      %v2464 = vpack.c.b16 %v2439, %v2438
      %v2465 = vpack.c.b16 %v2441, %v2440
      %v2466 = vpack.c.b16 %v2443, %v2442
      %v2467 = vpack.c.b16 %v2445, %v2444
      %v2468 = vpack.c.b16 %v2447, %v2446
      %v2469 = vpack.c.b16 %v2449, %v2448
      %v2470 = vpack.c.b16 %v2451, %v2450
      %v2471 = vpack.c.b16 %v2453, %v2452
      %v2472 = vpack.c.b16 %v2455, %v2454
      %v2473 = vpack.c.b16 %v2457, %v2456
      %v2474 = vpack.c.b16 %v2459, %v2458
      %v2475 = vpack.c.b16 %v2461, %v2460
      %2476 = vrot.lane.b32.xlu0 %v2462, 32
      %v2477 = vpop.permute.xlu0 %2476
      %2478 = vrot.lane.b32.xlu0 %v2463, 32
      %v2479 = vpop.permute.xlu0 %2478
      %2480 = vrot.lane.b32.xlu0 %v2464, 32
      %v2481 = vpop.permute.xlu0 %2480
      %2482 = vrot.lane.b32.xlu0 %v2465, 32
      %v2483 = vpop.permute.xlu0 %2482
      %2484 = vrot.lane.b32.xlu0 %v2466, 32
      %v2485 = vpop.permute.xlu0 %2484
      %2486 = vrot.lane.b32.xlu0 %v2467, 32
      %v2487 = vpop.permute.xlu0 %2486
      %2488 = vrot.lane.b32.xlu0 %v2468, 32
      %v2489 = vpop.permute.xlu0 %2488
      %2490 = vrot.lane.b32.xlu0 %v2469, 32
      %v2491 = vpop.permute.xlu0 %2490
      %2492 = vrot.lane.b32.xlu0 %v2470, 32
      %v2493 = vpop.permute.xlu0 %2492
      %2494 = vrot.lane.b32.xlu0 %v2471, 32
      %v2495 = vpop.permute.xlu0 %2494
      %2496 = vrot.lane.b32.xlu0 %v2472, 32
      %v2497 = vpop.permute.xlu0 %2496
      %2498 = vrot.lane.b32.xlu0 %v2473, 32
      %v2499 = vpop.permute.xlu0 %2498
      %2500 = vrot.lane.b32.xlu0 %v2474, 32
      %v2501 = vpop.permute.xlu0 %2500
      %2502 = vrot.lane.b32.xlu0 %v2475, 32
      %v2503 = vpop.permute.xlu0 %2502
      %vm2504 = vcmask 31744
      %v2507 = vsel %vm2504, %v1902, %v1959
      %v2510 = vsel %vm2504, %v1903, %v1961
      %v2513 = vsel %vm2504, %v1904, %v1963
      %v2516 = vsel %vm2504, %v1905, %v1965
      %v2519 = vsel %vm2504, %v1906, %v1967
      %v2522 = vsel %vm2504, %v1907, %v1969
      %v2525 = vsel %vm2504, %v1908, %v1971
      %v2528 = vsel %vm2504, %v1909, %v1973
      %v2531 = vsel %vm2504, %v1910, %v1975
      %v2534 = vsel %vm2504, %v1911, %v1977
      %v2537 = vsel %vm2504, %v1912, %v1979
      %v2540 = vsel %vm2504, %v1913, %v1981
      %v2543 = vsel %vm2504, %v1914, %v1983
      %v2546 = vsel %vm2504, %v1915, %v1985
      %vm2547 = vcmask 64512
      %v2549 = vsel %vm2547, %v2507, %v2029
      %v2551 = vsel %vm2547, %v2510, %v2031
      %v2553 = vsel %vm2547, %v2513, %v2033
      %v2555 = vsel %vm2547, %v2516, %v2035
      %v2557 = vsel %vm2547, %v2519, %v2037
      %v2559 = vsel %vm2547, %v2522, %v2039
      %v2561 = vsel %vm2547, %v2525, %v2041
      %v2563 = vsel %vm2547, %v2528, %v2043
      %v2565 = vsel %vm2547, %v2531, %v2045
      %v2567 = vsel %vm2547, %v2534, %v2047
      %v2569 = vsel %vm2547, %v2537, %v2049
      %v2571 = vsel %vm2547, %v2540, %v2051
      %v2573 = vsel %vm2547, %v2543, %v2053
      %v2575 = vsel %vm2547, %v2546, %v2055
      %vm2576 = vcmask 97280
      %v2578 = vsel %vm2576, %v2549, %v2113
      %v2580 = vsel %vm2576, %v2551, %v2115
      %v2582 = vsel %vm2576, %v2553, %v2117
      %v2584 = vsel %vm2576, %v2555, %v2119
      %v2586 = vsel %vm2576, %v2557, %v2121
      %v2588 = vsel %vm2576, %v2559, %v2123
      %v2590 = vsel %vm2576, %v2561, %v2125
      %v2592 = vsel %vm2576, %v2563, %v2127
      %v2594 = vsel %vm2576, %v2565, %v2129
      %v2596 = vsel %vm2576, %v2567, %v2131
      %v2598 = vsel %vm2576, %v2569, %v2133
      %v2600 = vsel %vm2576, %v2571, %v2135
      %v2602 = vsel %vm2576, %v2573, %v2137
      %v2604 = vsel %vm2576, %v2575, %v2139
      %vm2605 = vcmask 130048
      %v2607 = vsel %vm2605, %v2578, %v2183
      %v2609 = vsel %vm2605, %v2580, %v2185
      %v2611 = vsel %vm2605, %v2582, %v2187
      %v2613 = vsel %vm2605, %v2584, %v2189
      %v2615 = vsel %vm2605, %v2586, %v2191
      %v2617 = vsel %vm2605, %v2588, %v2193
      %v2619 = vsel %vm2605, %v2590, %v2195
      %v2621 = vsel %vm2605, %v2592, %v2197
      %v2623 = vsel %vm2605, %v2594, %v2199
      %v2625 = vsel %vm2605, %v2596, %v2201
      %v2627 = vsel %vm2605, %v2598, %v2203
      %v2629 = vsel %vm2605, %v2600, %v2205
      %v2631 = vsel %vm2605, %v2602, %v2207
      %v2633 = vsel %vm2605, %v2604, %v2209
      %vm2634 = vcmask 162816
      %v2636 = vsel %vm2634, %v2607, %v2253
      %v2638 = vsel %vm2634, %v2609, %v2255
      %v2640 = vsel %vm2634, %v2611, %v2257
      %v2642 = vsel %vm2634, %v2613, %v2259
      %v2644 = vsel %vm2634, %v2615, %v2261
      %v2646 = vsel %vm2634, %v2617, %v2263
      %v2648 = vsel %vm2634, %v2619, %v2265
      %v2650 = vsel %vm2634, %v2621, %v2267
      %v2652 = vsel %vm2634, %v2623, %v2269
      %v2654 = vsel %vm2634, %v2625, %v2271
      %v2656 = vsel %vm2634, %v2627, %v2273
      %v2658 = vsel %vm2634, %v2629, %v2275
      %v2660 = vsel %vm2634, %v2631, %v2277
      %v2662 = vsel %vm2634, %v2633, %v2279
      %vm2663 = vcmask 195584
      %v2665 = vsel %vm2663, %v2636, %v2337
      %v2667 = vsel %vm2663, %v2638, %v2339
      %v2669 = vsel %vm2663, %v2640, %v2341
      %v2671 = vsel %vm2663, %v2642, %v2343
      %v2673 = vsel %vm2663, %v2644, %v2345
      %v2675 = vsel %vm2663, %v2646, %v2347
      %v2677 = vsel %vm2663, %v2648, %v2349
      %v2679 = vsel %vm2663, %v2650, %v2351
      %v2681 = vsel %vm2663, %v2652, %v2353
      %v2683 = vsel %vm2663, %v2654, %v2355
      %v2685 = vsel %vm2663, %v2656, %v2357
      %v2687 = vsel %vm2663, %v2658, %v2359
      %v2689 = vsel %vm2663, %v2660, %v2361
      %v2691 = vsel %vm2663, %v2662, %v2363
      %vm2692 = vcmask 228352
      %v2694 = vsel %vm2692, %v2665, %v2407
      %v2696 = vsel %vm2692, %v2667, %v2409
      %v2698 = vsel %vm2692, %v2669, %v2411
      %v2700 = vsel %vm2692, %v2671, %v2413
      %v2702 = vsel %vm2692, %v2673, %v2415
      %v2704 = vsel %vm2692, %v2675, %v2417
      %v2706 = vsel %vm2692, %v2677, %v2419
      %v2708 = vsel %vm2692, %v2679, %v2421
      %v2710 = vsel %vm2692, %v2681, %v2423
      %v2712 = vsel %vm2692, %v2683, %v2425
      %v2714 = vsel %vm2692, %v2685, %v2427
      %v2716 = vsel %vm2692, %v2687, %v2429
      %v2718 = vsel %vm2692, %v2689, %v2431
      %v2720 = vsel %vm2692, %v2691, %v2433
      %vm2721 = vcmask 261120
      %v2723 = vsel %vm2721, %v2694, %v2477
      %v2725 = vsel %vm2721, %v2696, %v2479
      %v2727 = vsel %vm2721, %v2698, %v2481
      %v2729 = vsel %vm2721, %v2700, %v2483
      %v2731 = vsel %vm2721, %v2702, %v2485
      %v2733 = vsel %vm2721, %v2704, %v2487
      %v2735 = vsel %vm2721, %v2706, %v2489
      %v2737 = vsel %vm2721, %v2708, %v2491
      %v2739 = vsel %vm2721, %v2710, %v2493
      %v2741 = vsel %vm2721, %v2712, %v2495
      %v2743 = vsel %vm2721, %v2714, %v2497
      %v2745 = vsel %vm2721, %v2716, %v2499
      %v2747 = vsel %vm2721, %v2718, %v2501
      %v2749 = vsel %vm2721, %v2720, %v2503
      %v2750 = vld [vmem:[%s237] sm:$0xf]
      %v2751 = vld [vmem:[%s237 + $0x4] sm:$0xf]
      %v2752 = vld [vmem:[%s237 + $0x8] sm:$0xf]
      %v2753 = vld [vmem:[%s237 + $0xc] sm:$0xf]
      %v2754 = vld [vmem:[%s237 + $0x10] sm:$0x3]
      %v2756 = vlaneseq
      %v2757 = vshrl.u32 %v2756, 7
      %v2758 = vsub.s32 0, %v2757
      %v2759 = vrot.slane %v255, %v2758
      %v2766 = vunpack.c.l.b16 %v2750
      %v2767 = vunpack.c.l.b16 %v2751
      %v2768 = vunpack.c.l.b16 %v2752
      %v2769 = vunpack.c.l.b16 %v2753
      %v2770 = vunpack.c.l.b16 %v2754
      %v2771 = vpack.c.b16 %v2767, %v2766
      %v2772 = vpack.c.b16 %v2769, %v2768
      %v2773 = vpack.c.b16 %v2770, %v2770
      %vm2776 = vcmask 293888
      %v2777 = vsel %vm2776, %v2723, 0
      %v2779 = vsel %vm2776, %v2725, 0
      %v2781 = vsel %vm2776, %v2727, 0
      %v2783 = vsel %vm2776, %v2729, 0
      %v2785 = vsel %vm2776, %v2731, 0
      %v2787 = vsel %vm2776, %v2733, 0
      %v2789 = vsel %vm2776, %v2735, 0
      %v2791 = vsel %vm2776, %v2737, 0
      %v2793 = vsel %vm2776, %v2739, 0
      %v2795 = vsel %vm2776, %v2741, 0
      %v2797 = vsel %vm2776, %v2743, 0
      %v2799 = vsel %vm2776, %v2745, 0
      %v2801 = vsel %vm2776, %v2747, 0
      %v2803 = vsel %vm2776, %v2749, 0
      %vm2805 = vcmask 1041408
      %v2807 = vsel %vm2805, %v2773, 0
      %2809 = vmatprep.subr.bf16.mxu0 0
      %2810 = vmatpush1.bf16.msra.mxu0 %v2771
      %2811 = vmatprep.subr.bf16.mxu0 0
      %2812 = vmatpush1.bf16.msra.mxu0 %v2772
      %2813 = vmatprep.subr.bf16.mxu0 0
      %2814 = vmatpush1.bf16.msra.mxu0 %v2807
      %2815 = vmatprep.subr.bf16.mxu0 0
      %2816 = vmatpush1.bf16.msra.mxu0 0
      %2817 = vmatprep.subr.bf16.mxu0 0
      %2818 = vmatpush1.bf16.msra.mxu0 0
      %2819 = vmatprep.subr.bf16.mxu0 0
      %2820 = vmatpush1.bf16.msra.mxu0 0
      %2821 = vmatprep.subr.bf16.mxu0 0
      %2822 = vmatpush1.bf16.msra.mxu0 0
      %2823 = vmatprep.subr.bf16.mxu0 0
      %2824 = vmatpush1.bf16.msra.mxu0 0
      %2825 = vmatprep.subr.bf16.mxu0 0
      %2826 = vmatpush1.bf16.msra.mxu0 0
      %2827 = vmatprep.subr.bf16.mxu0 0
      %2828 = vmatpush1.bf16.msra.mxu0 0
      %2829 = vmatprep.subr.bf16.mxu0 0
      %2830 = vmatpush1.bf16.msra.mxu0 0
      %2831 = vmatprep.subr.bf16.mxu0 0
      %2832 = vmatpush1.bf16.msra.mxu0 0
      %2833 = vmatprep.subr.bf16.mxu0 0
      %2834 = vmatpush1.bf16.msra.mxu0 0
      %2835 = vmatprep.subr.bf16.mxu0 0
      %2836 = vmatpush1.bf16.msra.mxu0 0
      %2837 = vmatprep.subr.bf16.mxu0 0
      %2838 = vmatpush1.bf16.msra.mxu0 0
      %2839 = vmatprep.subr.bf16.mxu0 0
      %2840 = vmatpush1.bf16.msra.mxu0 0
      %2841 = vmatprep.mubr.bf16.mxu0 0
      %2842 = vmatmul.mubr.bf16.gmra.mrb[0].mxu0 %v2777
      %v2843 = vpop.f32.mrb[0].mxu0
      %v2844 = vadd.f32 %v2759, %v2843
      %v2845 = vpop.f32.mrb[0].mxu0
      %v2846 = vpop.f32.mrb[0].mxu0
      %v2847 = vadd.f32 %v2759, %v2846
      %v2848 = vpop.f32.mrb[0].mxu0
      %2849 = vmatprep.mubr.bf16.mxu0 0
      %2850 = vmatmul.mubr.bf16.gmra.mrb[0].mxu0 %v2779
      %v2851 = vpop.f32.mrb[0].mxu0
      %v2852 = vadd.f32 %v2759, %v2851
      %v2853 = vpop.f32.mrb[0].mxu0
      %v2854 = vpop.f32.mrb[0].mxu0
      %v2855 = vadd.f32 %v2759, %v2854
      %v2856 = vpop.f32.mrb[0].mxu0
      %2857 = vmatprep.mubr.bf16.mxu0 0
      %2858 = vmatmul.mubr.bf16.gmra.mrb[0].mxu0 %v2781
      %v2859 = vpop.f32.mrb[0].mxu0
      %v2860 = vadd.f32 %v2759, %v2859
      %v2861 = vpop.f32.mrb[0].mxu0
      %v2862 = vpop.f32.mrb[0].mxu0
      %v2863 = vadd.f32 %v2759, %v2862
      %v2864 = vpop.f32.mrb[0].mxu0
      %2865 = vmatprep.mubr.bf16.mxu0 0
      %2866 = vmatmul.mubr.bf16.gmra.mrb[0].mxu0 %v2783
      %v2867 = vpop.f32.mrb[0].mxu0
      %v2868 = vadd.f32 %v2759, %v2867
      %v2869 = vpop.f32.mrb[0].mxu0
      %v2870 = vpop.f32.mrb[0].mxu0
      %v2871 = vadd.f32 %v2759, %v2870
      %v2872 = vpop.f32.mrb[0].mxu0
      %2873 = vmatprep.mubr.bf16.mxu0 0
      %2874 = vmatmul.mubr.bf16.gmra.mrb[0].mxu0 %v2785
      %v2875 = vpop.f32.mrb[0].mxu0
      %v2876 = vadd.f32 %v2759, %v2875
      %v2877 = vpop.f32.mrb[0].mxu0
      %v2878 = vpop.f32.mrb[0].mxu0
      %v2879 = vadd.f32 %v2759, %v2878
      %v2880 = vpop.f32.mrb[0].mxu0
      %2881 = vmatprep.mubr.bf16.mxu0 0
      %2882 = vmatmul.mubr.bf16.gmra.mrb[0].mxu0 %v2787
      %v2883 = vpop.f32.mrb[0].mxu0
      %v2884 = vadd.f32 %v2759, %v2883
      %v2885 = vpop.f32.mrb[0].mxu0
      %v2886 = vpop.f32.mrb[0].mxu0
      %v2887 = vadd.f32 %v2759, %v2886
      %v2888 = vpop.f32.mrb[0].mxu0
      %2889 = vmatprep.mubr.bf16.mxu0 0
      %2890 = vmatmul.mubr.bf16.gmra.mrb[0].mxu0 %v2789
      %v2891 = vpop.f32.mrb[0].mxu0
      %v2892 = vadd.f32 %v2759, %v2891
      %v2893 = vpop.f32.mrb[0].mxu0
      %v2894 = vpop.f32.mrb[0].mxu0
      %v2895 = vadd.f32 %v2759, %v2894
      %v2896 = vpop.f32.mrb[0].mxu0
      %2897 = vmatprep.mubr.bf16.mxu0 0
      %2898 = vmatmul.mubr.bf16.gmra.mrb[0].mxu0 %v2791
      %v2899 = vpop.f32.mrb[0].mxu0
      %v2900 = vadd.f32 %v2759, %v2899
      %v2901 = vpop.f32.mrb[0].mxu0
      %v2902 = vpop.f32.mrb[0].mxu0
      %v2903 = vadd.f32 %v2759, %v2902
      %v2904 = vpop.f32.mrb[0].mxu0
      %2905 = vmatprep.mubr.bf16.mxu0 0
      %2906 = vmatmul.mubr.bf16.gmra.mrb[0].mxu0 %v2793
      %v2907 = vpop.f32.mrb[0].mxu0
      %v2908 = vadd.f32 %v2759, %v2907
      %v2909 = vpop.f32.mrb[0].mxu0
      %v2910 = vpop.f32.mrb[0].mxu0
      %v2911 = vadd.f32 %v2759, %v2910
      %v2912 = vpop.f32.mrb[0].mxu0
      %2913 = vmatprep.mubr.bf16.mxu0 0
      %2914 = vmatmul.mubr.bf16.gmra.mrb[0].mxu0 %v2795
      %v2915 = vpop.f32.mrb[0].mxu0
      %v2916 = vadd.f32 %v2759, %v2915
      %v2917 = vpop.f32.mrb[0].mxu0
      %v2918 = vpop.f32.mrb[0].mxu0
      %v2919 = vadd.f32 %v2759, %v2918
      %v2920 = vpop.f32.mrb[0].mxu0
      %2921 = vmatprep.mubr.bf16.mxu0 0
      %2922 = vmatmul.mubr.bf16.gmra.mrb[0].mxu0 %v2797
      %v2923 = vpop.f32.mrb[0].mxu0
      %v2924 = vadd.f32 %v2759, %v2923
      %v2925 = vpop.f32.mrb[0].mxu0
      %v2926 = vpop.f32.mrb[0].mxu0
      %v2927 = vadd.f32 %v2759, %v2926
      %v2928 = vpop.f32.mrb[0].mxu0
      %2929 = vmatprep.mubr.bf16.mxu0 0
      %2930 = vmatmul.mubr.bf16.gmra.mrb[0].mxu0 %v2799
      %v2931 = vpop.f32.mrb[0].mxu0
      %v2932 = vadd.f32 %v2759, %v2931
      %v2933 = vpop.f32.mrb[0].mxu0
      %v2934 = vpop.f32.mrb[0].mxu0
      %v2935 = vadd.f32 %v2759, %v2934
      %v2936 = vpop.f32.mrb[0].mxu0
      %2937 = vmatprep.mubr.bf16.mxu0 0
      %2938 = vmatmul.mubr.bf16.gmra.mrb[0].mxu0 %v2801
      %v2939 = vpop.f32.mrb[0].mxu0
      %v2940 = vadd.f32 %v2759, %v2939
      %v2941 = vpop.f32.mrb[0].mxu0
      %v2942 = vpop.f32.mrb[0].mxu0
      %v2943 = vadd.f32 %v2759, %v2942
      %v2944 = vpop.f32.mrb[0].mxu0
      %2945 = vmatprep.mubr.bf16.mxu0 0
      %2946 = vmatmul.mubr.bf16.gmra.mrb[0].mxu0 %v2803
      %v2947 = vpop.f32.mrb[0].mxu0
      %v2948 = vadd.f32 %v2759, %v2947
      %v2949 = vpop.f32.mrb[0].mxu0
      %v2950 = vpop.f32.mrb[0].mxu0
      %v2951 = vadd.f32 %v2759, %v2950
      %v2952 = vpop.f32.mrb[0].mxu0
      %2953 = vdwg.mxu0
      %v2954 = vmax.f32 %v2844, 0.0
      %v2955 = vmax.f32 %v2847, 0.0
      %v2956 = vmax.f32 %v2852, 0.0
      %v2957 = vmax.f32 %v2855, 0.0
      %v2958 = vmax.f32 %v2860, 0.0
      %v2959 = vmax.f32 %v2863, 0.0
      %v2960 = vmax.f32 %v2868, 0.0
      %v2961 = vmax.f32 %v2871, 0.0
      %v2962 = vmax.f32 %v2876, 0.0
      %v2963 = vmax.f32 %v2879, 0.0
      %v2964 = vmax.f32 %v2884, 0.0
      %v2965 = vmax.f32 %v2887, 0.0
      %v2966 = vmax.f32 %v2892, 0.0
      %v2967 = vmax.f32 %v2895, 0.0
      %v2968 = vmax.f32 %v2900, 0.0
      %v2969 = vmax.f32 %v2903, 0.0
      %v2970 = vmax.f32 %v2908, 0.0
      %v2971 = vmax.f32 %v2911, 0.0
      %v2972 = vmax.f32 %v2916, 0.0
      %v2973 = vmax.f32 %v2919, 0.0
      %v2974 = vmax.f32 %v2924, 0.0
      %v2975 = vmax.f32 %v2927, 0.0
      %v2976 = vmax.f32 %v2932, 0.0
      %v2977 = vmax.f32 %v2935, 0.0
      %v2978 = vmax.f32 %v2940, 0.0
      %v2979 = vmax.f32 %v2943, 0.0
      %v2980 = vmax.f32 %v2948, 0.0
      %v2981 = vmax.f32 %v2951, 0.0
      %v2982 = vpack.c.bf16 %v2955, %v2954
      %v2983 = vpack.c.bf16 %v2957, %v2956
      %v2984 = vpack.c.bf16 %v2959, %v2958
      %v2985 = vpack.c.bf16 %v2961, %v2960
      %v2986 = vpack.c.bf16 %v2963, %v2962
      %v2987 = vpack.c.bf16 %v2965, %v2964
      %v2988 = vpack.c.bf16 %v2967, %v2966
      %v2989 = vpack.c.bf16 %v2969, %v2968
      %v2990 = vpack.c.bf16 %v2971, %v2970
      %v2991 = vpack.c.bf16 %v2973, %v2972
      %v2992 = vpack.c.bf16 %v2975, %v2974
      %v2993 = vpack.c.bf16 %v2977, %v2976
      %v2994 = vpack.c.bf16 %v2979, %v2978
      %v2995 = vpack.c.bf16 %v2981, %v2980
      %v3010 = vunpack.c.l.b16 %v2982
      %v3011 = vunpack.c.h.b16 %v2982
      %v3012 = vunpack.c.l.b16 %v2983
      %v3013 = vunpack.c.h.b16 %v2983
      %v3014 = vunpack.c.l.b16 %v2984
      %v3015 = vunpack.c.h.b16 %v2984
      %v3016 = vunpack.c.l.b16 %v2985
      %v3017 = vunpack.c.h.b16 %v2985
      %v3018 = vunpack.c.l.b16 %v2986
      %v3019 = vunpack.c.h.b16 %v2986
      %v3020 = vunpack.c.l.b16 %v2987
      %v3021 = vunpack.c.h.b16 %v2987
      %v3022 = vunpack.c.l.b16 %v2988
      %v3023 = vunpack.c.h.b16 %v2988
      %v3024 = vunpack.c.l.b16 %v2989
      %v3025 = vunpack.c.h.b16 %v2989
      %v3026 = vunpack.c.l.b16 %v2990
      %v3027 = vunpack.c.h.b16 %v2990
      %v3028 = vunpack.c.l.b16 %v2991
      %v3029 = vunpack.c.h.b16 %v2991
      %v3030 = vunpack.c.l.b16 %v2992
      %v3031 = vunpack.c.h.b16 %v2992
      %v3032 = vunpack.c.l.b16 %v2993
      %v3033 = vunpack.c.h.b16 %v2993
      %v3034 = vunpack.c.l.b16 %v2994
      %v3035 = vunpack.c.h.b16 %v2994
      %v3036 = vunpack.c.l.b16 %v2995
      %v3037 = vunpack.c.h.b16 %v2995
      %v3038 = vpack.c.b16 %v3010, %v3010
      %v3039 = vpack.c.b16 %v3011, %v3011
      %v3040 = vpack.c.b16 %v3012, %v3012
      %v3041 = vpack.c.b16 %v3013, %v3013
      %v3042 = vpack.c.b16 %v3014, %v3014
      %v3043 = vpack.c.b16 %v3015, %v3015
      %v3044 = vpack.c.b16 %v3016, %v3016
      %v3045 = vpack.c.b16 %v3017, %v3017
      %v3046 = vpack.c.b16 %v3018, %v3018
      %v3047 = vpack.c.b16 %v3019, %v3019
      %v3048 = vpack.c.b16 %v3020, %v3020
      %v3049 = vpack.c.b16 %v3021, %v3021
      %v3050 = vpack.c.b16 %v3022, %v3022
      %v3051 = vpack.c.b16 %v3023, %v3023
      %v3052 = vpack.c.b16 %v3024, %v3024
      %v3053 = vpack.c.b16 %v3025, %v3025
      %v3054 = vpack.c.b16 %v3026, %v3026
      %v3055 = vpack.c.b16 %v3027, %v3027
      %v3056 = vpack.c.b16 %v3028, %v3028
      %v3057 = vpack.c.b16 %v3029, %v3029
      %v3058 = vpack.c.b16 %v3030, %v3030
      %v3059 = vpack.c.b16 %v3031, %v3031
      %v3060 = vpack.c.b16 %v3032, %v3032
      %v3061 = vpack.c.b16 %v3033, %v3033
      %v3062 = vpack.c.b16 %v3034, %v3034
      %v3063 = vpack.c.b16 %v3035, %v3035
      %v3064 = vpack.c.b16 %v3036, %v3036
      %v3065 = vpack.c.b16 %v3037, %v3037
      %3094 = vst [vmem:[%s252] sm:$0xf] %v3038
      %3095 = vst [vmem:[%s252 + $0x4] sm:$0xf] %v3039
      %3096 = vst [vmem:[%s252 + $0x8] sm:$0xf] %v3040
      %3097 = vst [vmem:[%s252 + $0xc] sm:$0xf] %v3041
      %3098 = vst [vmem:[%s252 + $0x10] sm:$0xf] %v3042
      %3099 = vst [vmem:[%s252 + $0x14] sm:$0xf] %v3043
      %3100 = vst [vmem:[%s252 + $0x18] sm:$0xf] %v3044
      %3101 = vst [vmem:[%s252 + $0x1c] sm:$0xf] %v3045
      %3102 = vst [vmem:[%s252 + $0x20] sm:$0xf] %v3046
      %3103 = vst [vmem:[%s252 + $0x24] sm:$0xf] %v3047
      %3104 = vst [vmem:[%s252 + $0x28] sm:$0xf] %v3048
      %3105 = vst [vmem:[%s252 + $0x2c] sm:$0xf] %v3049
      %3106 = vst [vmem:[%s252 + $0x30] sm:$0xf] %v3050
      %3107 = vst [vmem:[%s252 + $0x34] sm:$0xf] %v3051
      %3108 = vst [vmem:[%s252 + $0x38] sm:$0xf] %v3052
      %3109 = vst [vmem:[%s252 + $0x3c] sm:$0xf] %v3053
      %3110 = vst [vmem:[%s252 + $0x40] sm:$0xf] %v3054
      %3111 = vst [vmem:[%s252 + $0x44] sm:$0xf] %v3055
      %3112 = vst [vmem:[%s252 + $0x48] sm:$0xf] %v3056
      %3113 = vst [vmem:[%s252 + $0x4c] sm:$0xf] %v3057
      %3114 = vst [vmem:[%s252 + $0x50] sm:$0xf] %v3058
      %3115 = vst [vmem:[%s252 + $0x54] sm:$0xf] %v3059
      %3116 = vst [vmem:[%s252 + $0x58] sm:$0xf] %v3060
      %3117 = vst [vmem:[%s252 + $0x5c] sm:$0xf] %v3061
      %3118 = vst [vmem:[%s252 + $0x60] sm:$0xf] %v3062
      %3119 = vst [vmem:[%s252 + $0x64] sm:$0xf] %v3063
      %3120 = vst [vmem:[%s252 + $0x68] sm:$0xf] %v3064
      %3121 = vst [vmem:[%s252 + $0x6c] sm:$0xf] %v3065
      %s3122 = smul.u32 28, %s21
      %p3123 = scmp.lt.s32.totalorder %s19, 1
      %s3124 = scalar_select %p3123, %s19, 1
      %p3125 = scmp.lt.s32.totalorder %s3122, 27
      %s3126 = scalar_select %p3125, %s3122, 27
      %p3127 = scmp.lt.s32.totalorder %s20, 0
      %s3128 = scalar_select %p3127, %s20, 0
      %s3129 = sadd.s32 %s3128, %s3126
      %s3130 = smul.addr %s3124, 28
      %s3131 = sadd.s32 %s3129, %s3130
      %s3132 = smul.addr %s3131, 4
      %s3133 = scalar_lea.vmem %s3, %s3132
      // Predicated region
      $region33: #{conv2d_norm_relu.1} parent=31 // pred_check
        %p3134 = pneg %p135
      $region34: #{conv2d_norm_relu.1} parent=31 // pred_check_branch
        %3136 = sbr.rel (%p3134) target = $region36
      $region35: #{conv2d_norm_relu.1} parent=31 // pred_region
        %s3137 = smul.u32 28, %s21
      $region36: #{conv2d_norm_relu.1} parent=31 // pred_fallthru
        _
    $region32: #{conv2d_norm_relu.1} parent=5 // pred_fallthru
      _
    %p3138 = scmp.le.s32.totalorder 2, %s9
    // Predicated region
    $region37: #{conv2d_norm_relu.1} parent=5 // pred_check
      %p3139 = pneg %p3138
    $region38: #{conv2d_norm_relu.1} parent=5 // pred_check_branch
      %3141 = sbr.rel (%p3139) target = $region40
    $region39: #{conv2d_norm_relu.1} parent=5 // pred_region
      %s3142 = ssub.s32 %s9, 2
      // Predicated region
      $region41: #{conv2d_norm_relu.1} parent=39 // pred_check
        %p3143 = pneg %p141
      $region42: #{conv2d_norm_relu.1} parent=39 // pred_check_branch
        %3145 = sbr.rel (%p3143) target = $region44
      $region43: #{conv2d_norm_relu.1} parent=39 // pred_region
        %s3146 = smul.u32 28, %s24
        %p3147 = scmp.lt.s32.totalorder %s22, 1
        %s3148 = scalar_select %p3147, %s22, 1
        %p3149 = scmp.lt.s32.totalorder %s3146, 27
        %s3150 = scalar_select %p3149, %s3146, 27
        %p3151 = scmp.lt.s32.totalorder %s23, 0
        %s3152 = scalar_select %p3151, %s23, 0
        %s3153 = sadd.s32 %s3152, %s3150
        %s3154 = smul.addr %s3148, 28
        %s3155 = sadd.s32 %s3153, %s3154
        %s3156 = smul.addr %s3155, 4
        %s3157 = scalar_lea.vmem %s3, %s3156
      $region44: #{conv2d_norm_relu.1} parent=39 // pred_fallthru
        _
    $region40: #{conv2d_norm_relu.1} parent=5 // pred_fallthru
      _
  $region6: #{conv2d_norm_relu.1} parent=0 // loop_footer
    %s13 = sadd.s32 1, %s9
  $region7: #{conv2d_norm_relu.1} parent=0 // loop_footer_branch
    %8 = sbr.rel target = $region3
  $region8: #{conv2d_norm_relu.1} parent=0 // loop_exit
    _

</llo_original>
